<compile_context>
chip_gen: v6e
topology: v6e:2x2x1
jax: 0.10.0
libtpu: 0.0.40
codegen_flags: <defaults>
</compile_context>

<pallas_src>
import numpy as np
import jax
import jax.numpy as jnp
from jax import lax
from jax.experimental import pallas as pl
from jax.experimental.pallas import tpu as pltpu

EPS = 1e-6
NUM_GROUPS = 32


# -----------------------------------------------------------------------------
# Fused kernel: one grid step == one batch element, everything VMEM-resident.
# -----------------------------------------------------------------------------
def fused_attn_kernel(x_ref, bmat_ref, gamma_ref, beta_ref,
                      wqkv_ref, bqkv_ref, wp_ref, bp_ref, o_ref):
    f32, bf16 = jnp.float32, jnp.bfloat16

    x_cn = x_ref[0]                                   # (C, N) f32, native NCHW
    c, n = x_cn.shape
    inv_cnt = jnp.float32(1.0 / (n * (c // NUM_GROUPS)))

    # Channels-last view for the attention math: a single on-chip XLU transpose
    # replaces a full NCHW->NHWC HBM pass in the wrapper.
    x_nc = jnp.transpose(x_cn)                        # (N, C) f32

    # ---- GroupNorm(32) statistics, fully in VMEM (two-pass, f32) ----
    bmat = bmat_ref[...]                              # (C, C) block-diag group avg
    colsum = jnp.sum(x_nc, axis=0, keepdims=True)                          # (1, C)
    mean_c = jnp.dot(colsum, bmat, preferred_element_type=f32) * inv_cnt   # (1, C)
    d = x_nc - mean_c                                                      # (N, C)
    colss = jnp.sum(d * d, axis=0, keepdims=True)                          # (1, C)
    var_c = jnp.dot(colss, bmat, preferred_element_type=f32) * inv_cnt     # (1, C)
    h = d * lax.rsqrt(var_c + EPS) * gamma_ref[...] + beta_ref[...]        # (N, C)

    # ---- fused QKV 1x1 conv (bf16 MXU operands, f32 accumulation) ----
    qkv = jnp.dot(h.astype(bf16), wqkv_ref[...],
                  preferred_element_type=f32) + bqkv_ref[...]              # (N, 3C)
    q = qkv[:, :c].astype(bf16)       # 1/sqrt(C) already folded into Wq/bq
    k = qkv[:, c:2 * c].astype(bf16)
    v = qkv[:, 2 * c:].astype(bf16)

    # ---- attention: all keys resident => plain (not online) softmax ----
    s = lax.dot_general(q, k, (((1,), (1,)), ((), ())),
                        preferred_element_type=f32)                        # (N, N)
    s_max = jnp.max(s, axis=-1, keepdims=True)
    p = jnp.exp(s - s_max)                                                 # (N, N)
    l = jnp.sum(p, axis=-1, keepdims=True)                                 # (N, 1)
    o_att = jnp.dot(p.astype(bf16), v, preferred_element_type=f32)         # (N, C)
    o_att = o_att * pl.reciprocal(l, approx=True)    # normalize the small matrix

    # ---- proj_out + residual, back to channels-first for the NCHW output ----
    proj = jnp.dot(o_att.astype(bf16), wp_ref[...],
                   preferred_element_type=f32) + bp_ref[...]               # (N, C)
    o_ref[0] = (x_cn + jnp.transpose(proj)).astype(o_ref.dtype)            # (C, N)


def attn_block(x_nchw, params):
    """AttnBlock forward.  x_nchw: (B, C, H, W) f32 -> (B, C, H, W) f32."""
    b, c, hh, ww = x_nchw.shape
    n = hh * ww
    assert c % NUM_GROUPS == 0, "GroupNorm(32) needs C % 32 == 0"
    assert c % 128 == 0, "fused-QKV slicing assumes lane-dense C (C % 128 == 0)"
    assert n % 8 == 0, "spatial positions must be sublane-aligned"
    cg = c // NUM_GROUPS

    gamma, beta, wq, bq, wk, bk, wv, bv, wp, bp = params
    f32, bf16 = jnp.float32, jnp.bfloat16

    # Native NCHW layout kept: (B, C, H, W) -> (B, C, N) is a free reshape,
    # no HBM transpose pass (layout handled on-chip in the kernel).
    x = x_nchw.reshape(b, c, n).astype(f32)

    # Fused QKV weights; fold the 1/sqrt(C) softmax scale into the q slice.
    scale = jnp.float32(int(c) ** (-0.5))
    wqkv = jnp.concatenate([wq * scale, wk, wv], axis=1).astype(bf16)   # (C, 3C)
    bqkv = jnp.concatenate([bq * scale, bk, bv], axis=1).astype(f32)    # (1, 3C)
    wp_bf = wp.astype(bf16)
    bp_f = bp.astype(f32)

    # Block-diagonal group-averaging matrix: bmat[i, j] = (i//cg == j//cg).
    ch = jnp.arange(c, dtype=jnp.int32)
    bmat = (ch[:, None] // cg == ch[None, :] // cg).astype(f32)         # (C, C)

    # ---- VMEM budget (explicit, capped well below v7x's 64 MiB physical) ----
    io_bytes = 2 * (2 * c * n * 4)                       # x + out, double-buffered
    wgt_bytes = 2 * (c * 3 * c * 2 + c * c * 2 + c * c * 4 + 12 * c * 4)
    inter_bytes = (3 * n * c * 4            # x_nc, d/h, o_att
                   + n * 3 * c * 4 + n * 3 * c * 2   # qkv f32 + bf16 q/k/v
                   + 2 * n * n * 4          # scores + probabilities
                   + 2 * n * c * 4)         # proj (N,C) + transposed result
    est = io_bytes + wgt_bytes + inter_bytes
    assert est < (36 << 20), (
        "per-batch working set too large for the fully-fused resident path; "
        "use a flash-tiled variant for this resolution")
    vmem_bytes = int(min(max(est + (8 << 20), 32 << 20), 48 << 20))

    flops = b * (2 * n * c * 3 * c       # QKV projection
                 + 4 * n * n * c         # q@k^T and p@v
                 + 2 * n * c * c)        # proj_out
    bytes_accessed = b * 2 * c * n * 4 + c * 3 * c * 2 + 2 * c * c * 4

    out = pl.pallas_call(
        fused_attn_kernel,
        out_shape=jax.ShapeDtypeStruct((b, c, n), f32),
        grid_spec=pltpu.PrefetchScalarGridSpec(
            num_scalar_prefetch=0,
            grid=(b,),
            in_specs=[
                pl.BlockSpec((1, c, n), lambda i: (i, 0, 0)),     # x (native NCHW)
                pl.BlockSpec((c, c), lambda i: (0, 0)),           # group-avg matrix
                pl.BlockSpec((1, c), lambda i: (0, 0)),           # gamma
                pl.BlockSpec((1, c), lambda i: (0, 0)),           # beta
                pl.BlockSpec((c, 3 * c), lambda i: (0, 0)),       # Wqkv (bf16)
                pl.BlockSpec((1, 3 * c), lambda i: (0, 0)),       # bqkv
                pl.BlockSpec((c, c), lambda i: (0, 0)),           # Wp (bf16)
                pl.BlockSpec((1, c), lambda i: (0, 0)),           # bp
            ],
            out_specs=pl.BlockSpec((1, c, n), lambda i: (i, 0, 0)),
        ),
        compiler_params=pltpu.CompilerParams(
            dimension_semantics=("parallel",),
            vmem_limit_bytes=vmem_bytes),
        cost_estimate=pl.CostEstimate(flops=int(flops),
                                      transcendentals=int(b * n * n),
                                      bytes_accessed=int(bytes_accessed)),
    )(x, bmat, gamma, beta, wqkv, bqkv, wp_bf, bp_f)

    return out.reshape(b, c, hh, ww)


def init_params(key, c):
    """Deterministic synthetic parameters matching AttnBlock(in_channels=c)."""
    ks = jax.random.split(key, 10)
    scale = 1.0 / np.sqrt(c)

    def conv1x1(kw, kb):
        # PyTorch Conv2d weight (C_out, C_in, 1, 1) -> pass W^T (C_in, C_out)
        w = jax.random.normal(kw, (c, c), jnp.float32) * scale
        bias = jax.random.normal(kb, (1, c), jnp.float32) * 0.1
        return w.T, bias

    gamma = 1.0 + 0.1 * jax.random.normal(ks[0], (1, c), jnp.float32)
    beta = 0.1 * jax.random.normal(ks[1], (1, c), jnp.float32)
    wq, bq = conv1x1(ks[2], ks[3])
    wk, bk = conv1x1(ks[4], ks[5])
    wv, bv = conv1x1(ks[6], ks[7])
    wp, bp = conv1x1(ks[8], ks[9])
    return (gamma, beta, wq, bq, wk, bk, wv, bv, wp, bp)


def attn_block_ref(x_nchw, params, matmul_dtype=jnp.float32):
    """Pure-JAX reference mirroring the PyTorch forward.  `matmul_dtype=bf16`
    mirrors the kernel's MXU operand precision (f32 accumulation)."""
    gamma, beta, wq, bq, wk, bk, wv, bv, wp, bp = params
    b, c, h, w = x_nchw.shape
    n = h * w
    cg = c // NUM_GROUPS

    def mm(a, m):
        return jnp.matmul(a.astype(matmul_dtype), m.astype(matmul_dtype),
                          preferred_element_type=jnp.float32)

    xg = x_nchw.reshape(b, NUM_GROUPS, cg, h, w)
    mean = xg.mean(axis=(2, 3, 4), keepdims=True)
    var = jnp.square(xg - mean).mean(axis=(2, 3, 4), keepdims=True)
    hn = ((xg - mean) * lax.rsqrt(var + EPS)).reshape(b, c, h, w)
    hn = hn * gamma.reshape(1, c, 1, 1) + beta.reshape(1, c, 1, 1)
    hp = jnp.transpose(hn, (0, 2, 3, 1)).reshape(b, n, c)
    q = mm(hp, wq) + bq
    k = mm(hp, wk) + bk
    v = mm(hp, wv) + bv
    attn = jax.nn.softmax(mm(q, jnp.swapaxes(k, 1, 2)) * (int(c) ** -0.5),
                          axis=-1)
    o = mm(attn, v)
    o = mm(o, wp) + bp
    o = jnp.transpose(o.reshape(b, h, w, c), (0, 3, 1, 2))
    return x_nchw + o


if __name__ == "__main__":
    # Small but representative AttnBlock shape: GroupNorm(32) needs C % 32 == 0,
    # lane-dense fused-QKV slicing needs C % 128 == 0 (the production Decoder
    # uses C=512 at H=W=16, i.e. the same N=256 spatial extent tested here).
    B, C, H, W = 2, 128, 16, 16
    key = jax.random.PRNGKey(0)
    kx, kp = jax.random.split(key)
    x = jax.random.normal(kx, (B, C, H, W), jnp.float32)
    params = init_params(kp, C)

    out = jax.block_until_ready(jax.jit(attn_block)(x, params))

    # 1) tight check against a precision-matched (bf16-matmul) reference.
    ref_bf16 = jax.block_until_ready(attn_block_ref(x, params, jnp.bfloat16))
    np.testing.assert_allclose(np.asarray(out), np.asarray(ref_bf16),
                               rtol=2e-2, atol=2e-2)

    # 2) coarse global bound against the exact f32 reference (kernel uses bf16
    #    MXU operands with f32 accumulation, so element-wise 1e-4 is not
    #    expected; relative L2 error bounds the quantization noise).
    ref_f32 = jax.block_until_ready(attn_block_ref(x, params, jnp.float32))
    diff = np.asarray(out) - np.asarray(ref_f32)
    rel_l2 = np.linalg.norm(diff) / np.linalg.norm(np.asarray(ref_f32))
    assert rel_l2 < 2e-2, f"relative L2 error too large: {rel_l2}"

    print("KERNEL_OK")
</pallas_src>

<mosaic_0001>
module attributes {stable_mosaic.version = 11 : i64} {
  func.func @fused_attn_kernel(%arg0: i32, %arg1: memref<1x128x256xf32, #tpu.memory_space<vmem>>, %arg2: memref<128x128xf32, #tpu.memory_space<vmem>>, %arg3: memref<1x128xf32, #tpu.memory_space<vmem>>, %arg4: memref<1x128xf32, #tpu.memory_space<vmem>>, %arg5: memref<128x384xbf16, #tpu.memory_space<vmem>>, %arg6: memref<1x384xf32, #tpu.memory_space<vmem>>, %arg7: memref<128x128xbf16, #tpu.memory_space<vmem>>, %arg8: memref<1x128xf32, #tpu.memory_space<vmem>>, %arg9: memref<1x128x256xf32, #tpu.memory_space<vmem>>) attributes {dimension_semantics = [#tpu.dimension_semantics<parallel>], iteration_bounds = array<i64: 2>, scalar_prefetch = 0 : i64, scratch_operands = 0 : i64, tpu.core_type = #tpu.core_type<tc>, window_params = [{transform_indices = @transform_0, window_bounds = array<i64: 1, 128, 256>}, {pipeline_mode = #tpu.pipeline_mode<synchronous>, transform_indices = @transform_1, window_bounds = array<i64: 128, 128>}, {pipeline_mode = #tpu.pipeline_mode<synchronous>, transform_indices = @transform_2, window_bounds = array<i64: 1, 128>}, {pipeline_mode = #tpu.pipeline_mode<synchronous>, transform_indices = @transform_3, window_bounds = array<i64: 1, 128>}, {pipeline_mode = #tpu.pipeline_mode<synchronous>, transform_indices = @transform_4, window_bounds = array<i64: 128, 384>}, {pipeline_mode = #tpu.pipeline_mode<synchronous>, transform_indices = @transform_5, window_bounds = array<i64: 1, 384>}, {pipeline_mode = #tpu.pipeline_mode<synchronous>, transform_indices = @transform_6, window_bounds = array<i64: 128, 128>}, {pipeline_mode = #tpu.pipeline_mode<synchronous>, transform_indices = @transform_7, window_bounds = array<i64: 1, 128>}, {transform_indices = @transform_8, window_bounds = array<i64: 1, 128, 256>}]} {
    %c0 = arith.constant 0 : index
    %c0_0 = arith.constant 0 : index
    %c0_1 = arith.constant 0 : index
    %0 = vector.load %arg1[%c0, %c0_0, %c0_1] : memref<1x128x256xf32, #tpu.memory_space<vmem>>, vector<1x128x256xf32>
    %1 = vector.shape_cast %0 : vector<1x128x256xf32> to vector<128x256xf32>
    %2 = tpu.transpose %1, [1, 0] : vector<128x256xf32> -> vector<256x128xf32>
    %c0_2 = arith.constant 0 : index
    %c0_3 = arith.constant 0 : index
    %3 = vector.load %arg2[%c0_2, %c0_3] : memref<128x128xf32, #tpu.memory_space<vmem>>, vector<128x128xf32>
    %cst = arith.constant dense<0.000000e+00> : vector<128xf32>
    %4 = vector.multi_reduction <add>, %2, %cst [0] : vector<256x128xf32> to vector<128xf32>
    %5 = vector.shape_cast %4 : vector<128xf32> to vector<1x128xf32>
    %cst_4 = arith.constant dense<0.000000e+00> : vector<1x128xf32>
    %6 = tpu.matmul %5, %3, %cst_4 {dimension_numbers = #tpu.dot_dimension_numbers<[1], [0], [0], [1], [0, 0, 1, 1], [], []>} : vector<1x128xf32>, vector<128x128xf32>, vector<1x128xf32> -> vector<1x128xf32>
    %cst_5 = arith.constant 9.765625E-4 : f32
    %7 = vector.broadcast %cst_5 : f32 to vector<1x128xf32>
    %8 = arith.mulf %6, %7 : vector<1x128xf32>
    %9 = vector.broadcast %8 : vector<1x128xf32> to vector<256x128xf32>
    %10 = arith.subf %2, %9 : vector<256x128xf32>
    %11 = arith.mulf %10, %10 : vector<256x128xf32>
    %cst_6 = arith.constant dense<0.000000e+00> : vector<128xf32>
    %12 = vector.multi_reduction <add>, %11, %cst_6 [0] : vector<256x128xf32> to vector<128xf32>
    %13 = vector.shape_cast %12 : vector<128xf32> to vector<1x128xf32>
    %cst_7 = arith.constant dense<0.000000e+00> : vector<1x128xf32>
    %14 = tpu.matmul %13, %3, %cst_7 {dimension_numbers = #tpu.dot_dimension_numbers<[1], [0], [0], [1], [0, 0, 1, 1], [], []>} : vector<1x128xf32>, vector<128x128xf32>, vector<1x128xf32> -> vector<1x128xf32>
    %cst_8 = arith.constant 9.765625E-4 : f32
    %15 = vector.broadcast %cst_8 : f32 to vector<1x128xf32>
    %16 = arith.mulf %14, %15 : vector<1x128xf32>
    %cst_9 = arith.constant 9.99999997E-7 : f32
    %17 = vector.broadcast %cst_9 : f32 to vector<1x128xf32>
    %18 = arith.addf %16, %17 : vector<1x128xf32>
    %19 = math.rsqrt %18 : vector<1x128xf32>
    %20 = vector.broadcast %19 : vector<1x128xf32> to vector<256x128xf32>
    %21 = arith.mulf %10, %20 : vector<256x128xf32>
    %c0_10 = arith.constant 0 : index
    %c0_11 = arith.constant 0 : index
    %22 = vector.load %arg3[%c0_10, %c0_11] : memref<1x128xf32, #tpu.memory_space<vmem>>, vector<1x128xf32>
    %23 = vector.broadcast %22 : vector<1x128xf32> to vector<256x128xf32>
    %24 = arith.mulf %21, %23 : vector<256x128xf32>
    %c0_12 = arith.constant 0 : index
    %c0_13 = arith.constant 0 : index
    %25 = vector.load %arg4[%c0_12, %c0_13] : memref<1x128xf32, #tpu.memory_space<vmem>>, vector<1x128xf32>
    %26 = vector.broadcast %25 : vector<1x128xf32> to vector<256x128xf32>
    %27 = arith.addf %24, %26 : vector<256x128xf32>
    %28 = arith.truncf %27 : vector<256x128xf32> to vector<256x128xbf16>
    %c0_14 = arith.constant 0 : index
    %c0_15 = arith.constant 0 : index
    %29 = vector.load %arg5[%c0_14, %c0_15] : memref<128x384xbf16, #tpu.memory_space<vmem>>, vector<128x384xbf16>
    %cst_16 = arith.constant dense<0.000000e+00> : vector<256x384xf32>
    %30 = tpu.matmul %28, %29, %cst_16 {dimension_numbers = #tpu.dot_dimension_numbers<[1], [0], [0], [1], [0, 0, 1, 1], [], []>} : vector<256x128xbf16>, vector<128x384xbf16>, vector<256x384xf32> -> vector<256x384xf32>
    %c0_17 = arith.constant 0 : index
    %c0_18 = arith.constant 0 : index
    %31 = vector.load %arg6[%c0_17, %c0_18] : memref<1x384xf32, #tpu.memory_space<vmem>>, vector<1x384xf32>
    %32 = vector.broadcast %31 : vector<1x384xf32> to vector<256x384xf32>
    %33 = arith.addf %30, %32 : vector<256x384xf32>
    %34 = vector.extract_strided_slice %33 {offsets = [0, 0], sizes = [256, 128], strides = [1, 1]} : vector<256x384xf32> to vector<256x128xf32>
    %35 = arith.truncf %34 : vector<256x128xf32> to vector<256x128xbf16>
    %36 = vector.extract_strided_slice %33 {offsets = [0, 128], sizes = [256, 128], strides = [1, 1]} : vector<256x384xf32> to vector<256x128xf32>
    %37 = arith.truncf %36 : vector<256x128xf32> to vector<256x128xbf16>
    %38 = vector.extract_strided_slice %33 {offsets = [0, 256], sizes = [256, 128], strides = [1, 1]} : vector<256x384xf32> to vector<256x128xf32>
    %39 = arith.truncf %38 : vector<256x128xf32> to vector<256x128xbf16>
    %cst_19 = arith.constant dense<0.000000e+00> : vector<256x256xf32>
    %40 = tpu.matmul %35, %37, %cst_19 {dimension_numbers = #tpu.dot_dimension_numbers<[1], [1], [0], [0], [0, 0, 1, 0], [], []>} : vector<256x128xbf16>, vector<256x128xbf16>, vector<256x256xf32> -> vector<256x256xf32>
    %cst_20 = arith.constant dense<0xFF800000> : vector<256xf32>
    %41 = vector.multi_reduction <maximumf>, %40, %cst_20 [1] : vector<256x256xf32> to vector<256xf32>
    %42 = vector.shape_cast %41 : vector<256xf32> to vector<256x1xf32>
    %43 = vector.broadcast %42 : vector<256x1xf32> to vector<256x256xf32>
    %44 = arith.subf %40, %43 : vector<256x256xf32>
    %45 = math.exp %44 : vector<256x256xf32>
    %cst_21 = arith.constant dense<0.000000e+00> : vector<256xf32>
    %46 = vector.multi_reduction <add>, %45, %cst_21 [1] : vector<256x256xf32> to vector<256xf32>
    %47 = vector.shape_cast %46 : vector<256xf32> to vector<256x1xf32>
    %48 = arith.truncf %45 : vector<256x256xf32> to vector<256x256xbf16>
    %cst_22 = arith.constant dense<0.000000e+00> : vector<256x128xf32>
    %49 = tpu.matmul %48, %39, %cst_22 {dimension_numbers = #tpu.dot_dimension_numbers<[1], [0], [0], [1], [0, 0, 1, 1], [], []>} : vector<256x256xbf16>, vector<256x128xbf16>, vector<256x128xf32> -> vector<256x128xf32>
    %50 = tpu.reciprocal %47 {approx = true} : vector<256x1xf32> -> vector<256x1xf32>
    %51 = vector.broadcast %50 : vector<256x1xf32> to vector<256x128xf32>
    %52 = arith.mulf %49, %51 : vector<256x128xf32>
    %53 = arith.truncf %52 : vector<256x128xf32> to vector<256x128xbf16>
    %c0_23 = arith.constant 0 : index
    %c0_24 = arith.constant 0 : index
    %54 = vector.load %arg7[%c0_23, %c0_24] : memref<128x128xbf16, #tpu.memory_space<vmem>>, vector<128x128xbf16>
    %cst_25 = arith.constant dense<0.000000e+00> : vector<256x128xf32>
    %55 = tpu.matmul %53, %54, %cst_25 {dimension_numbers = #tpu.dot_dimension_numbers<[1], [0], [0], [1], [0, 0, 1, 1], [], []>} : vector<256x128xbf16>, vector<128x128xbf16>, vector<256x128xf32> -> vector<256x128xf32>
    %c0_26 = arith.constant 0 : index
    %c0_27 = arith.constant 0 : index
    %56 = vector.load %arg8[%c0_26, %c0_27] : memref<1x128xf32, #tpu.memory_space<vmem>>, vector<1x128xf32>
    %57 = vector.broadcast %56 : vector<1x128xf32> to vector<256x128xf32>
    %58 = arith.addf %55, %57 : vector<256x128xf32>
    %59 = tpu.transpose %58, [1, 0] : vector<256x128xf32> -> vector<128x256xf32>
    %60 = arith.addf %1, %59 : vector<128x256xf32>
    %c0_28 = arith.constant 0 : index
    %c0_29 = arith.constant 0 : index
    %c0_30 = arith.constant 0 : index
    %61 = vector.load %arg9[%c0_28, %c0_29, %c0_30] : memref<1x128x256xf32, #tpu.memory_space<vmem>>, vector<1x128x256xf32>
    %62 = vector.shape_cast %61 : vector<1x128x256xf32> to vector<128x256xf32>
    %63 = vector.shape_cast %60 : vector<128x256xf32> to vector<1x128x256xf32>
    tpu.vector_store %arg9[%c0_28, %c0_29, %c0_30], %63 {strides = array<i32>} : memref<1x128x256xf32, #tpu.memory_space<vmem>>, vector<1x128x256xf32>,
    return
  }
  func.func @transform_0(%arg0: i32) -> (i32, i32, i32) {
    %c0_i32 = arith.constant 0 : i32
    %c0_i32_0 = arith.constant 0 : i32
    %c0_i32_1 = arith.constant 0 : i32
    return %arg0, %c0_i32, %c0_i32_0 : i32, i32, i32
  }
  func.func @transform_1(%arg0: i32) -> (i32, i32) {
    %c0_i32 = arith.constant 0 : i32
    %c0_i32_0 = arith.constant 0 : i32
    %c0_i32_1 = arith.constant 0 : i32
    return %c0_i32, %c0_i32_0 : i32, i32
  }
  func.func @transform_2(%arg0: i32) -> (i32, i32) {
    %c0_i32 = arith.constant 0 : i32
    %c0_i32_0 = arith.constant 0 : i32
    %c0_i32_1 = arith.constant 0 : i32
    return %c0_i32, %c0_i32_0 : i32, i32
  }
  func.func @transform_3(%arg0: i32) -> (i32, i32) {
    %c0_i32 = arith.constant 0 : i32
    %c0_i32_0 = arith.constant 0 : i32
    %c0_i32_1 = arith.constant 0 : i32
    return %c0_i32, %c0_i32_0 : i32, i32
  }
  func.func @transform_4(%arg0: i32) -> (i32, i32) {
    %c0_i32 = arith.constant 0 : i32
    %c0_i32_0 = arith.constant 0 : i32
    %c0_i32_1 = arith.constant 0 : i32
    return %c0_i32, %c0_i32_0 : i32, i32
  }
  func.func @transform_5(%arg0: i32) -> (i32, i32) {
    %c0_i32 = arith.constant 0 : i32
    %c0_i32_0 = arith.constant 0 : i32
    %c0_i32_1 = arith.constant 0 : i32
    return %c0_i32, %c0_i32_0 : i32, i32
  }
  func.func @transform_6(%arg0: i32) -> (i32, i32) {
    %c0_i32 = arith.constant 0 : i32
    %c0_i32_0 = arith.constant 0 : i32
    %c0_i32_1 = arith.constant 0 : i32
    return %c0_i32, %c0_i32_0 : i32, i32
  }
  func.func @transform_7(%arg0: i32) -> (i32, i32) {
    %c0_i32 = arith.constant 0 : i32
    %c0_i32_0 = arith.constant 0 : i32
    %c0_i32_1 = arith.constant 0 : i32
    return %c0_i32, %c0_i32_0 : i32, i32
  }
  func.func @transform_8(%arg0: i32) -> (i32, i32, i32) {
    %c0_i32 = arith.constant 0 : i32
    %c0_i32_0 = arith.constant 0 : i32
    %c0_i32_1 = arith.constant 0 : i32
    return %arg0, %c0_i32, %c0_i32_0 : i32, i32, i32
  }
}

</mosaic_0001>

<llo_original>
// kernel: attn_block.1
$region0: #{attn_block.1}
  #allocation0 [shape = 'u32[]', space=smem, size = 0x4, offset = 0x4, fixed_abs, tag = 'smem constant byte address 0x4 - core index']
  #allocation1 [shape = 'u32[144,128]{1,0:T(1,128)}', space=vmem, size = 0x12000, scoped, tag = 'internal scratch']
  %s0 = inlined_call_operand.vmem [shape: f32[2,128,256], index: 0, kind: input, shape index: {}]
  %s1 = inlined_call_operand.vmem [shape: f32[128,128], index: 1, kind: input, shape index: {}]
  %s2 = inlined_call_operand.vmem [shape: f32[1,128], index: 2, kind: input, shape index: {}]
  %s3 = inlined_call_operand.vmem [shape: f32[1,128], index: 3, kind: input, shape index: {}]
  %s4 = inlined_call_operand.vmem [shape: bf16[128,384], index: 4, kind: input, shape index: {}]
  %s5 = inlined_call_operand.vmem [shape: f32[1,384], index: 5, kind: input, shape index: {}]
  %s6 = inlined_call_operand.vmem [shape: bf16[128,128], index: 6, kind: input, shape index: {}]
  %s7 = inlined_call_operand.vmem [shape: f32[1,128], index: 7, kind: input, shape index: {}]
  %s8 = inlined_call_operand.vmem [shape: f32[2,128,256], index: 8, kind: output, shape index: {}]
  %s9 = sld [smem:[#allocation0]]
  $region65: #{attn_block.1} parent=0
    _
  %s11 = ssub.s32 1, %s9
  %s12 = scalar_select 0, %s11, %s9
  loop: start=0, step=1, limit=4
  $region2: #{attn_block.1} parent=0 // loop_pre_header
    _
  $region3: #{attn_block.1} parent=0 // loop_header
    %s14 = sphi 0, %s18
    %p15 = scmp.ge.s32.totalorder %s14, 4
    %s24 = sphi 0, %s26
    %s27 = sphi 0, %s24
    %s28 = sphi 0, %s27
    %s44 = sphi 0, %s28
    %s48 = sphi 0, %s48
    %s50 = sphi 0, %s48
    %s51 = sphi 0, %s50
    %s65 = sphi 0, %s51
    %s69 = sphi 0, %s69
    %s71 = sphi 0, %s69
    %s72 = sphi 0, %s71
    %s86 = sphi 0, %s72
    %s90 = sphi 0, %s90
    %s92 = sphi 0, %s90
    %s93 = sphi 0, %s92
    %s107 = sphi 0, %s93
    %s111 = sphi 0, %s111
    %s113 = sphi 0, %s111
    %s114 = sphi 0, %s113
    %s128 = sphi 0, %s114
    %s132 = sphi 0, %s132
    %s134 = sphi 0, %s132
    %s135 = sphi 0, %s134
    %s149 = sphi 0, %s135
    %s153 = sphi 0, %s153
    %s155 = sphi 0, %s153
    %s156 = sphi 0, %s155
    %s170 = sphi 0, %s156
    %s174 = sphi 0, %s174
    %s176 = sphi 0, %s174
    %s177 = sphi 0, %s176
    %s191 = sphi 0, %s177
    %s197 = sphi 0, %s199
    %s200 = sphi 0, %s197
    %s201 = sphi 0, %s200
    %s217 = sphi 0, %s201
  $region4: #{attn_block.1} parent=0 // loop_header_branch
    %17 = sbr.rel (%p15) target = $region8
  $region5: #{attn_block.1} parent=0 // loop_body
    %s19 = ssub.s32 %s14, 1
    %s20 = ssub.s32 %s14, 2
    %s21 = sadd.s32 %s14, 1
    %s22 = ssub.s32 %s14, %s21
    %p23 = scmp.eq.s32.totalorder %s22, 0
    %s25 = sadd.s32 %s24, 1
    %s26 = scalar_select %p23, %s24, %s25
    %p29 = pneg %p23
    %p30 = scmp.eq.s32.totalorder %s14, 1
    %p31 = por %p29, %p30
    %p32 = scmp.ne.s32.totalorder %s24, %s27
    %p33 = scmp.eq.s32.totalorder %s14, 0
    %p34 = por %p32, %p33
    %p35 = scmp.ne.s32.totalorder %s24, %s27
    %p36 = scmp.eq.s32.totalorder %s19, 1
    %p37 = por %p35, %p36
    %p38 = scmp.ne.s32.totalorder %s27, %s28
    %p39 = scmp.eq.s32.totalorder %s19, 0
    %p40 = por %p38, %p39
    %p41 = scmp.ne.s32.totalorder %s27, %s28
    %p42 = scmp.eq.s32.totalorder %s20, 1
    %p43 = por %p41, %p42
    %p45 = scmp.ne.s32.totalorder %s28, %s44
    %p46 = scmp.eq.s32.totalorder %s20, 0
    %p47 = por %p45, %p46
    %s49 = sadd.s32 %s48, 1
    %p52 = scmp.eq.s32.totalorder %s14, 1
    %p53 = scmp.ne.s32.totalorder %s48, %s50
    %p54 = scmp.eq.s32.totalorder %s14, 0
    %p55 = por %p53, %p54
    %p56 = scmp.ne.s32.totalorder %s48, %s50
    %p57 = scmp.eq.s32.totalorder %s19, 1
    %p58 = por %p56, %p57
    %p59 = scmp.ne.s32.totalorder %s50, %s51
    %p60 = scmp.eq.s32.totalorder %s19, 0
    %p61 = por %p59, %p60
    %p62 = scmp.ne.s32.totalorder %s50, %s51
    %p63 = scmp.eq.s32.totalorder %s20, 1
    %p64 = por %p62, %p63
    %p66 = scmp.ne.s32.totalorder %s51, %s65
    %p67 = scmp.eq.s32.totalorder %s20, 0
    %p68 = por %p66, %p67
    %s70 = sadd.s32 %s69, 1
    %p73 = scmp.eq.s32.totalorder %s14, 1
    %p74 = scmp.ne.s32.totalorder %s69, %s71
    %p75 = scmp.eq.s32.totalorder %s14, 0
    %p76 = por %p74, %p75
    %p77 = scmp.ne.s32.totalorder %s69, %s71
    %p78 = scmp.eq.s32.totalorder %s19, 1
    %p79 = por %p77, %p78
    %p80 = scmp.ne.s32.totalorder %s71, %s72
    %p81 = scmp.eq.s32.totalorder %s19, 0
    %p82 = por %p80, %p81
    %p83 = scmp.ne.s32.totalorder %s71, %s72
    %p84 = scmp.eq.s32.totalorder %s20, 1
    %p85 = por %p83, %p84
    %p87 = scmp.ne.s32.totalorder %s72, %s86
    %p88 = scmp.eq.s32.totalorder %s20, 0
    %p89 = por %p87, %p88
    %s91 = sadd.s32 %s90, 1
    %p94 = scmp.eq.s32.totalorder %s14, 1
    %p95 = scmp.ne.s32.totalorder %s90, %s92
    %p96 = scmp.eq.s32.totalorder %s14, 0
    %p97 = por %p95, %p96
    %p98 = scmp.ne.s32.totalorder %s90, %s92
    %p99 = scmp.eq.s32.totalorder %s19, 1
    %p100 = por %p98, %p99
    %p101 = scmp.ne.s32.totalorder %s92, %s93
    %p102 = scmp.eq.s32.totalorder %s19, 0
    %p103 = por %p101, %p102
    %p104 = scmp.ne.s32.totalorder %s92, %s93
    %p105 = scmp.eq.s32.totalorder %s20, 1
    %p106 = por %p104, %p105
    %p108 = scmp.ne.s32.totalorder %s93, %s107
    %p109 = scmp.eq.s32.totalorder %s20, 0
    %p110 = por %p108, %p109
    %s112 = sadd.s32 %s111, 1
    %p115 = scmp.eq.s32.totalorder %s14, 1
    %p116 = scmp.ne.s32.totalorder %s111, %s113
    %p117 = scmp.eq.s32.totalorder %s14, 0
    %p118 = por %p116, %p117
    %p119 = scmp.ne.s32.totalorder %s111, %s113
    %p120 = scmp.eq.s32.totalorder %s19, 1
    %p121 = por %p119, %p120
    %p122 = scmp.ne.s32.totalorder %s113, %s114
    %p123 = scmp.eq.s32.totalorder %s19, 0
    %p124 = por %p122, %p123
    %p125 = scmp.ne.s32.totalorder %s113, %s114
    %p126 = scmp.eq.s32.totalorder %s20, 1
    %p127 = por %p125, %p126
    %p129 = scmp.ne.s32.totalorder %s114, %s128
    %p130 = scmp.eq.s32.totalorder %s20, 0
    %p131 = por %p129, %p130
    %s133 = sadd.s32 %s132, 1
    %p136 = scmp.eq.s32.totalorder %s14, 1
    %p137 = scmp.ne.s32.totalorder %s132, %s134
    %p138 = scmp.eq.s32.totalorder %s14, 0
    %p139 = por %p137, %p138
    %p140 = scmp.ne.s32.totalorder %s132, %s134
    %p141 = scmp.eq.s32.totalorder %s19, 1
    %p142 = por %p140, %p141
    %p143 = scmp.ne.s32.totalorder %s134, %s135
    %p144 = scmp.eq.s32.totalorder %s19, 0
    %p145 = por %p143, %p144
    %p146 = scmp.ne.s32.totalorder %s134, %s135
    %p147 = scmp.eq.s32.totalorder %s20, 1
    %p148 = por %p146, %p147
    %p150 = scmp.ne.s32.totalorder %s135, %s149
    %p151 = scmp.eq.s32.totalorder %s20, 0
    %p152 = por %p150, %p151
    %s154 = sadd.s32 %s153, 1
    %p157 = scmp.eq.s32.totalorder %s14, 1
    %p158 = scmp.ne.s32.totalorder %s153, %s155
    %p159 = scmp.eq.s32.totalorder %s14, 0
    %p160 = por %p158, %p159
    %p161 = scmp.ne.s32.totalorder %s153, %s155
    %p162 = scmp.eq.s32.totalorder %s19, 1
    %p163 = por %p161, %p162
    %p164 = scmp.ne.s32.totalorder %s155, %s156
    %p165 = scmp.eq.s32.totalorder %s19, 0
    %p166 = por %p164, %p165
    %p167 = scmp.ne.s32.totalorder %s155, %s156
    %p168 = scmp.eq.s32.totalorder %s20, 1
    %p169 = por %p167, %p168
    %p171 = scmp.ne.s32.totalorder %s156, %s170
    %p172 = scmp.eq.s32.totalorder %s20, 0
    %p173 = por %p171, %p172
    %s175 = sadd.s32 %s174, 1
    %p178 = scmp.eq.s32.totalorder %s14, 1
    %p179 = scmp.ne.s32.totalorder %s174, %s176
    %p180 = scmp.eq.s32.totalorder %s14, 0
    %p181 = por %p179, %p180
    %p182 = scmp.ne.s32.totalorder %s174, %s176
    %p183 = scmp.eq.s32.totalorder %s19, 1
    %p184 = por %p182, %p183
    %p185 = scmp.ne.s32.totalorder %s176, %s177
    %p186 = scmp.eq.s32.totalorder %s19, 0
    %p187 = por %p185, %p186
    %p188 = scmp.ne.s32.totalorder %s176, %s177
    %p189 = scmp.eq.s32.totalorder %s20, 1
    %p190 = por %p188, %p189
    %p192 = scmp.ne.s32.totalorder %s177, %s191
    %p193 = scmp.eq.s32.totalorder %s20, 0
    %p194 = por %p192, %p193
    %s195 = ssub.s32 %s14, %s21
    %p196 = scmp.eq.s32.totalorder %s195, 0
    %s198 = sadd.s32 %s197, 1
    %s199 = scalar_select %p196, %s197, %s198
    %p202 = pneg %p196
    %p203 = scmp.eq.s32.totalorder %s14, 1
    %p204 = por %p202, %p203
    %p205 = scmp.ne.s32.totalorder %s197, %s200
    %p206 = scmp.eq.s32.totalorder %s14, 0
    %p207 = por %p205, %p206
    %p208 = scmp.ne.s32.totalorder %s197, %s200
    %p209 = scmp.eq.s32.totalorder %s19, 1
    %p210 = por %p208, %p209
    %p211 = scmp.ne.s32.totalorder %s200, %s201
    %p212 = scmp.eq.s32.totalorder %s19, 0
    %p213 = por %p211, %p212
    %p214 = scmp.ne.s32.totalorder %s200, %s201
    %p215 = scmp.eq.s32.totalorder %s20, 1
    %p216 = por %p214, %p215
    %p218 = scmp.ne.s32.totalorder %s201, %s217
    %p219 = scmp.eq.s32.totalorder %s20, 0
    %p220 = por %p218, %p219
    %p221 = scmp.le.s32.totalorder 1, %s14
    %p222 = scmp.lt.s32.totalorder %s14, 3
    %p223 = pnand %p221, %p222
    %p224 = pneg %p223
    // Predicated region
    $region9: #{attn_block.1} parent=5 // pred_check
      _
    $region10: #{attn_block.1} parent=5 // pred_check_branch
      %226 = sbr.rel (%p223) target = $region12
    $region11: #{attn_block.1} parent=5 // pred_region
      %s227 = ssub.s32 %s14, 1
      // Predicated region
      $region13: #{attn_block.1} parent=11 // pred_check
        %p228 = pneg %p61
      $region14: #{attn_block.1} parent=11 // pred_check_branch
        %230 = sbr.rel (%p228) target = $region16
      $region15: #{attn_block.1} parent=11 // pred_region
        _
      $region16: #{attn_block.1} parent=11 // pred_fallthru
        _
      // Predicated region
      $region17: #{attn_block.1} parent=11 // pred_check
        %p231 = pneg %p82
      $region18: #{attn_block.1} parent=11 // pred_check_branch
        %233 = sbr.rel (%p231) target = $region20
      $region19: #{attn_block.1} parent=11 // pred_region
        _
      $region20: #{attn_block.1} parent=11 // pred_fallthru
        _
      // Predicated region
      $region21: #{attn_block.1} parent=11 // pred_check
        %p234 = pneg %p103
      $region22: #{attn_block.1} parent=11 // pred_check_branch
        %236 = sbr.rel (%p234) target = $region24
      $region23: #{attn_block.1} parent=11 // pred_region
        _
      $region24: #{attn_block.1} parent=11 // pred_fallthru
        _
      // Predicated region
      $region25: #{attn_block.1} parent=11 // pred_check
        %p237 = pneg %p124
      $region26: #{attn_block.1} parent=11 // pred_check_branch
        %239 = sbr.rel (%p237) target = $region28
      $region27: #{attn_block.1} parent=11 // pred_region
        _
      $region28: #{attn_block.1} parent=11 // pred_fallthru
        _
      // Predicated region
      $region29: #{attn_block.1} parent=11 // pred_check
        %p240 = pneg %p145
      $region30: #{attn_block.1} parent=11 // pred_check_branch
        %242 = sbr.rel (%p240) target = $region32
      $region31: #{attn_block.1} parent=11 // pred_region
        _
      $region32: #{attn_block.1} parent=11 // pred_fallthru
        _
      // Predicated region
      $region33: #{attn_block.1} parent=11 // pred_check
        %p243 = pneg %p166
      $region34: #{attn_block.1} parent=11 // pred_check_branch
        %245 = sbr.rel (%p243) target = $region36
      $region35: #{attn_block.1} parent=11 // pred_region
        _
      $region36: #{attn_block.1} parent=11 // pred_fallthru
        _
      // Predicated region
      $region37: #{attn_block.1} parent=11 // pred_check
        %p246 = pneg %p187
      $region38: #{attn_block.1} parent=11 // pred_check_branch
        %248 = sbr.rel (%p246) target = $region40
      $region39: #{attn_block.1} parent=11 // pred_region
        _
      $region40: #{attn_block.1} parent=11 // pred_fallthru
        _
    $region12: #{attn_block.1} parent=5 // pred_fallthru
      _
    %p249 = scmp.lt.s32.totalorder %s14, 2
    // Predicated region
    $region41: #{attn_block.1} parent=5 // pred_check
      %p250 = pneg %p249
    $region42: #{attn_block.1} parent=5 // pred_check_branch
      %252 = sbr.rel (%p250) target = $region44
    $region43: #{attn_block.1} parent=5 // pred_region
      // Predicated region
      $region45: #{attn_block.1} parent=43 // pred_check
        %p253 = pneg %p34
      $region46: #{attn_block.1} parent=43 // pred_check_branch
        %255 = sbr.rel (%p253) target = $region48
      $region47: #{attn_block.1} parent=43 // pred_region
        %p256 = scmp.lt.s32.totalorder %s14, 1
        %s257 = scalar_select %p256, %s14, 1
        %s258 = smul.addr %s257, 32
        %s259 = smul.addr %s258, 8
        %s260 = scalar_lea.vmem %s0, %s259
      $region48: #{attn_block.1} parent=43 // pred_fallthru
        _
    $region44: #{attn_block.1} parent=5 // pred_fallthru
      _
    %p261 = scmp.le.s32.totalorder 1, %s14
    %p262 = scmp.lt.s32.totalorder %s14, 3
    %p263 = pnand %p261, %p262
    %p264 = pneg %p263
    // Predicated region
    $region49: #{attn_block.1} parent=5 // pred_check
      _
    $region50: #{attn_block.1} parent=5 // pred_check_branch
      %266 = sbr.rel (%p263) target = $region52
    $region51: #{attn_block.1} parent=5 // pred_region
      %s267 = ssub.s32 %s14, 1
      %p268 = scmp.lt.s32.totalorder %s19, 1
      %s269 = scalar_select %p268, %s19, 1
      %s270 = smul.addr %s269, 32
      %s271 = smul.addr %s270, 8
      %s272 = scalar_lea.vmem %s0, %s271
      %p273 = pneg %p40
      %p274 = pneg %p37
      %p275 = pneg %p61
      %p276 = pneg %p58
      %p277 = pneg %p82
      %p278 = pneg %p79
      %p279 = pneg %p103
      %p280 = pneg %p100
      %p281 = pneg %p124
      %p282 = pneg %p121
      %p283 = pneg %p145
      %p284 = pneg %p142
      %p285 = pneg %p166
      %p286 = pneg %p163
      %p287 = pneg %p187
      %p288 = pneg %p184
      %p289 = pneg %p213
      %p290 = pneg %p210
      %p291 = scmp.lt.s32.totalorder %s19, 1
      %s292 = scalar_select %p291, %s19, 1
      %s293 = smul.addr %s292, 32
      %s294 = smul.addr %s293, 8
      %s295 = scalar_lea.vmem %s8, %s294
      %p296 = scmp.lt.s32.totalorder %s19, 1
      %s297 = scalar_select %p296, %s19, 1
      %s298 = smul.addr %s297, 32
      %s299 = smul.addr %s298, 8
      %s300 = scalar_lea.vmem %s0, %s299
      %p301 = scmp.lt.s32.totalorder %s19, 1
      %s302 = scalar_select %p301, %s19, 1
      %s303 = smul.addr %s302, 32
      %s304 = smul.addr %s303, 8
      %s305 = scalar_lea.vmem %s8, %s304
      %v307 = vld [vmem:[%s300] sm:$0xff]
      %v308 = vld [vmem:[%s300 + $0x8] sm:$0xff]
      %v309 = vld [vmem:[%s300 + $0x10] sm:$0xff]
      %v310 = vld [vmem:[%s300 + $0x18] sm:$0xff]
      %v311 = vld [vmem:[%s300 + $0x20] sm:$0xff]
      %v312 = vld [vmem:[%s300 + $0x28] sm:$0xff]
      %v313 = vld [vmem:[%s300 + $0x30] sm:$0xff]
      %v314 = vld [vmem:[%s300 + $0x38] sm:$0xff]
      %v315 = vld [vmem:[%s300 + $0x40] sm:$0xff]
      %v316 = vld [vmem:[%s300 + $0x48] sm:$0xff]
      %v317 = vld [vmem:[%s300 + $0x50] sm:$0xff]
      %v318 = vld [vmem:[%s300 + $0x58] sm:$0xff]
      %v319 = vld [vmem:[%s300 + $0x60] sm:$0xff]
      %v320 = vld [vmem:[%s300 + $0x68] sm:$0xff]
      %v321 = vld [vmem:[%s300 + $0x70] sm:$0xff]
      %v322 = vld [vmem:[%s300 + $0x78] sm:$0xff]
      %v323 = vld [vmem:[%s300 + $0x80] sm:$0xff]
      %v324 = vld [vmem:[%s300 + $0x88] sm:$0xff]
      %v325 = vld [vmem:[%s300 + $0x90] sm:$0xff]
      %v326 = vld [vmem:[%s300 + $0x98] sm:$0xff]
      %v327 = vld [vmem:[%s300 + $0xa0] sm:$0xff]
      %v328 = vld [vmem:[%s300 + $0xa8] sm:$0xff]
      %v329 = vld [vmem:[%s300 + $0xb0] sm:$0xff]
      %v330 = vld [vmem:[%s300 + $0xb8] sm:$0xff]
      %v331 = vld [vmem:[%s300 + $0xc0] sm:$0xff]
      %v332 = vld [vmem:[%s300 + $0xc8] sm:$0xff]
      %v333 = vld [vmem:[%s300 + $0xd0] sm:$0xff]
      %v334 = vld [vmem:[%s300 + $0xd8] sm:$0xff]
      %v335 = vld [vmem:[%s300 + $0xe0] sm:$0xff]
      %v336 = vld [vmem:[%s300 + $0xe8] sm:$0xff]
      %v337 = vld [vmem:[%s300 + $0xf0] sm:$0xff]
      %v338 = vld [vmem:[%s300 + $0xf8] sm:$0xff]
      %339 = vxpose.xlu0.b32.start [1/16] %v307, 128
      %340 = vxpose.xlu0.b32.cont [2/16] %v309, 128
      %341 = vxpose.xlu0.b32.cont [3/16] %v311, 128
      %342 = vxpose.xlu0.b32.cont [4/16] %v313, 128
      %343 = vxpose.xlu0.b32.cont [5/16] %v315, 128
      %344 = vxpose.xlu0.b32.cont [6/16] %v317, 128
      %345 = vxpose.xlu0.b32.cont [7/16] %v319, 128
      %346 = vxpose.xlu0.b32.cont [8/16] %v321, 128
      %347 = vxpose.xlu0.b32.cont [9/16] %v323, 128
      %348 = vxpose.xlu0.b32.cont [10/16] %v325, 128
      %349 = vxpose.xlu0.b32.cont [11/16] %v327, 128
      %350 = vxpose.xlu0.b32.cont [12/16] %v329, 128
      %351 = vxpose.xlu0.b32.cont [13/16] %v331, 128
      %352 = vxpose.xlu0.b32.cont [14/16] %v333, 128
      %353 = vxpose.xlu0.b32.cont [15/16] %v335, 128
      %354 = vxpose.xlu0.b32.end [16/16] %v337, 128
      %v355 = vpop.trf.xlu0
      %v356 = vpop.trf.xlu0
      %v357 = vpop.trf.xlu0
      %v358 = vpop.trf.xlu0
      %v359 = vpop.trf.xlu0
      %v360 = vpop.trf.xlu0
      %v361 = vpop.trf.xlu0
      %v362 = vpop.trf.xlu0
      %v363 = vpop.trf.xlu0
      %v364 = vpop.trf.xlu0
      %v365 = vpop.trf.xlu0
      %v366 = vpop.trf.xlu0
      %v367 = vpop.trf.xlu0
      %v368 = vpop.trf.xlu0
      %v369 = vpop.trf.xlu0
      %v370 = vpop.trf.xlu0
      %371 = vxpose.xlu0.b32.start [1/16] %v308, 128
      %372 = vxpose.xlu0.b32.cont [2/16] %v310, 128
      %373 = vxpose.xlu0.b32.cont [3/16] %v312, 128
      %374 = vxpose.xlu0.b32.cont [4/16] %v314, 128
      %375 = vxpose.xlu0.b32.cont [5/16] %v316, 128
      %376 = vxpose.xlu0.b32.cont [6/16] %v318, 128
      %377 = vxpose.xlu0.b32.cont [7/16] %v320, 128
      %378 = vxpose.xlu0.b32.cont [8/16] %v322, 128
      %379 = vxpose.xlu0.b32.cont [9/16] %v324, 128
      %380 = vxpose.xlu0.b32.cont [10/16] %v326, 128
      %381 = vxpose.xlu0.b32.cont [11/16] %v328, 128
      %382 = vxpose.xlu0.b32.cont [12/16] %v330, 128
      %383 = vxpose.xlu0.b32.cont [13/16] %v332, 128
      %384 = vxpose.xlu0.b32.cont [14/16] %v334, 128
      %385 = vxpose.xlu0.b32.cont [15/16] %v336, 128
      %386 = vxpose.xlu0.b32.end [16/16] %v338, 128
      %v387 = vpop.trf.xlu0
      %v388 = vpop.trf.xlu0
      %v389 = vpop.trf.xlu0
      %v390 = vpop.trf.xlu0
      %v391 = vpop.trf.xlu0
      %v392 = vpop.trf.xlu0
      %v393 = vpop.trf.xlu0
      %v394 = vpop.trf.xlu0
      %v395 = vpop.trf.xlu0
      %v396 = vpop.trf.xlu0
      %v397 = vpop.trf.xlu0
      %v398 = vpop.trf.xlu0
      %v399 = vpop.trf.xlu0
      %v400 = vpop.trf.xlu0
      %v401 = vpop.trf.xlu0
      %v402 = vpop.trf.xlu0
      %v403 = vld [vmem:[%s1] sm:$0xff]
      %v404 = vld [vmem:[%s1 + $0x8] sm:$0xff]
      %v405 = vld [vmem:[%s1 + $0x10] sm:$0xff]
      %v406 = vld [vmem:[%s1 + $0x18] sm:$0xff]
      %v407 = vld [vmem:[%s1 + $0x20] sm:$0xff]
      %v408 = vld [vmem:[%s1 + $0x28] sm:$0xff]
      %v409 = vld [vmem:[%s1 + $0x30] sm:$0xff]
      %v410 = vld [vmem:[%s1 + $0x38] sm:$0xff]
      %v411 = vld [vmem:[%s1 + $0x40] sm:$0xff]
      %v412 = vld [vmem:[%s1 + $0x48] sm:$0xff]
      %v413 = vld [vmem:[%s1 + $0x50] sm:$0xff]
      %v414 = vld [vmem:[%s1 + $0x58] sm:$0xff]
      %v415 = vld [vmem:[%s1 + $0x60] sm:$0xff]
      %v416 = vld [vmem:[%s1 + $0x68] sm:$0xff]
      %v417 = vld [vmem:[%s1 + $0x70] sm:$0xff]
      %v418 = vld [vmem:[%s1 + $0x78] sm:$0xff]
      %v419 = vadd.f32 %v355, %v356
      %v420 = vadd.f32 %v419, %v357
      %v421 = vadd.f32 %v420, %v358
      %v422 = vadd.f32 %v421, %v359
      %v423 = vadd.f32 %v422, %v360
      %v424 = vadd.f32 %v423, %v361
      %v425 = vadd.f32 %v424, %v362
      %v426 = vadd.f32 %v425, %v363
      %v427 = vadd.f32 %v426, %v364
      %v428 = vadd.f32 %v427, %v365
      %v429 = vadd.f32 %v428, %v366
      %v430 = vadd.f32 %v429, %v367
      %v431 = vadd.f32 %v430, %v368
      %v432 = vadd.f32 %v431, %v369
      %v433 = vadd.f32 %v432, %v370
      %v434 = vadd.f32 %v433, %v387
      %v435 = vadd.f32 %v434, %v388
      %v436 = vadd.f32 %v435, %v389
      %v437 = vadd.f32 %v436, %v390
      %v438 = vadd.f32 %v437, %v391
      %v439 = vadd.f32 %v438, %v392
      %v440 = vadd.f32 %v439, %v393
      %v441 = vadd.f32 %v440, %v394
      %v442 = vadd.f32 %v441, %v395
      %v443 = vadd.f32 %v442, %v396
      %v444 = vadd.f32 %v443, %v397
      %v445 = vadd.f32 %v444, %v398
      %v446 = vadd.f32 %v445, %v399
      %v447 = vadd.f32 %v446, %v400
      %v448 = vadd.f32 %v447, %v401
      %v449 = vadd.f32 %v448, %v402
      %v450 = vrot.slane %v449, 4
      %v451 = vadd.f32 %v449, %v450
      %v452 = vrot.slane %v451, 2
      %v453 = vadd.f32 %v451, %v452
      %v454 = vrot.slane %v453, 1
      %v455 = vadd.f32 %v453, %v454
      %456 = vmatprep.subr.mxu0 0.0
      %457 = vmatpush1.msra.mxu0 %v418
      %458 = vmatprep.subr.mxu0 0.0
      %459 = vmatpush1.msra.mxu0 %v417
      %460 = vmatprep.subr.mxu0 0.0
      %461 = vmatpush1.msra.mxu0 %v416
      %462 = vmatprep.subr.mxu0 0.0
      %463 = vmatpush1.msra.mxu0 %v415
      %464 = vmatprep.subr.mxu0 0.0
      %465 = vmatpush1.msra.mxu0 %v414
      %466 = vmatprep.subr.mxu0 0.0
      %467 = vmatpush1.msra.mxu0 %v413
      %468 = vmatprep.subr.mxu0 0.0
      %469 = vmatpush1.msra.mxu0 %v412
      %470 = vmatprep.subr.mxu0 0.0
      %471 = vmatpush1.msra.mxu0 %v411
      %472 = vmatprep.subr.mxu0 0.0
      %473 = vmatpush1.msra.mxu0 %v410
      %474 = vmatprep.subr.mxu0 0.0
      %475 = vmatpush1.msra.mxu0 %v409
      %476 = vmatprep.subr.mxu0 0.0
      %477 = vmatpush1.msra.mxu0 %v408
      %478 = vmatprep.subr.mxu0 0.0
      %479 = vmatpush1.msra.mxu0 %v407
      %480 = vmatprep.subr.mxu0 0.0
      %481 = vmatpush1.msra.mxu0 %v406
      %482 = vmatprep.subr.mxu0 0.0
      %483 = vmatpush1.msra.mxu0 %v405
      %484 = vmatprep.subr.mxu0 0.0
      %485 = vmatpush1.msra.mxu0 %v404
      %486 = vmatprep.subr.mxu0 0.0
      %487 = vmatpush1.msra.mxu0 %v403
      %488 = vmatprep.subr.mxu0 0.0
      %489 = vmatpush2.msra.mxu0 0.0
      %490 = vmatprep.subr.mxu0 0.0
      %491 = vmatpush2.msra.mxu0 0.0
      %492 = vmatprep.subr.mxu0 0.0
      %493 = vmatpush2.msra.mxu0 0.0
      %494 = vmatprep.subr.mxu0 0.0
      %495 = vmatpush2.msra.mxu0 0.0
      %496 = vmatprep.subr.mxu0 0.0
      %497 = vmatpush2.msra.mxu0 0.0
      %498 = vmatprep.subr.mxu0 0.0
      %499 = vmatpush2.msra.mxu0 0.0
      %500 = vmatprep.subr.mxu0 0.0
      %501 = vmatpush2.msra.mxu0 0.0
      %502 = vmatprep.subr.mxu0 0.0
      %503 = vmatpush2.msra.mxu0 0.0
      %504 = vmatprep.subr.mxu0 0.0
      %505 = vmatpush2.msra.mxu0 0.0
      %506 = vmatprep.subr.mxu0 0.0
      %507 = vmatpush2.msra.mxu0 0.0
      %508 = vmatprep.subr.mxu0 0.0
      %509 = vmatpush2.msra.mxu0 0.0
      %510 = vmatprep.subr.mxu0 0.0
      %511 = vmatpush2.msra.mxu0 0.0
      %512 = vmatprep.subr.mxu0 0.0
      %513 = vmatpush2.msra.mxu0 0.0
      %514 = vmatprep.subr.mxu0 0.0
      %515 = vmatpush2.msra.mxu0 0.0
      %516 = vmatprep.subr.mxu0 0.0
      %517 = vmatpush2.msra.mxu0 0.0
      %518 = vmatprep.subr.mxu0 0.0
      %519 = vmatpush2.msra.mxu0 0.0
      %520 = vmatprep.mubr.f32.mxu0 0.0
      %521 = vmatmul.mubr.f32.gmra.mxu0 %v455
      %v522 = vpop.f32.mrf.mxu0
      %v523 = vadd.f32 0.0, %v522
      %v524 = vpop.f32.mrf.mxu0
      %525 = vdwg.mxu0
      %v526 = vmul.f32 %v523, 0.0009765625
      %v527 = vlaneseq
      %v528 = vshrl.u32 %v527, 7
      %v529 = vsub.s32 0, %v528
      %v530 = vrot.slane %v526, %v529
      %v531 = vsub.f32 %v355, %v530
      %v532 = vsub.f32 %v356, %v530
      %v533 = vsub.f32 %v357, %v530
      %v534 = vsub.f32 %v358, %v530
      %v535 = vsub.f32 %v359, %v530
      %v536 = vsub.f32 %v360, %v530
      %v537 = vsub.f32 %v361, %v530
      %v538 = vsub.f32 %v362, %v530
      %v539 = vsub.f32 %v363, %v530
      %v540 = vsub.f32 %v364, %v530
      %v541 = vsub.f32 %v365, %v530
      %v542 = vsub.f32 %v366, %v530
      %v543 = vsub.f32 %v367, %v530
      %v544 = vsub.f32 %v368, %v530
      %v545 = vsub.f32 %v369, %v530
      %v546 = vsub.f32 %v370, %v530
      %v547 = vsub.f32 %v387, %v530
      %v548 = vsub.f32 %v388, %v530
      %v549 = vsub.f32 %v389, %v530
      %v550 = vsub.f32 %v390, %v530
      %v551 = vsub.f32 %v391, %v530
      %v552 = vsub.f32 %v392, %v530
      %v553 = vsub.f32 %v393, %v530
      %v554 = vsub.f32 %v394, %v530
      %v555 = vsub.f32 %v395, %v530
      %v556 = vsub.f32 %v396, %v530
      %v557 = vsub.f32 %v397, %v530
      %v558 = vsub.f32 %v398, %v530
      %v559 = vsub.f32 %v399, %v530
      %v560 = vsub.f32 %v400, %v530
      %v561 = vsub.f32 %v401, %v530
      %v562 = vsub.f32 %v402, %v530
      %v563 = vmul.f32 %v531, %v531
      %v564 = vmul.f32 %v532, %v532
      %v565 = vmul.f32 %v533, %v533
      %v566 = vmul.f32 %v534, %v534
      %v567 = vmul.f32 %v535, %v535
      %v568 = vmul.f32 %v536, %v536
      %v569 = vmul.f32 %v537, %v537
      %v570 = vmul.f32 %v538, %v538
      %v571 = vmul.f32 %v539, %v539
      %v572 = vmul.f32 %v540, %v540
      %v573 = vmul.f32 %v541, %v541
      %v574 = vmul.f32 %v542, %v542
      %v575 = vmul.f32 %v543, %v543
      %v576 = vmul.f32 %v544, %v544
      %v577 = vmul.f32 %v545, %v545
      %v578 = vmul.f32 %v546, %v546
      %v579 = vmul.f32 %v547, %v547
      %v580 = vmul.f32 %v548, %v548
      %v581 = vmul.f32 %v549, %v549
      %v582 = vmul.f32 %v550, %v550
      %v583 = vmul.f32 %v551, %v551
      %v584 = vmul.f32 %v552, %v552
      %v585 = vmul.f32 %v553, %v553
      %v586 = vmul.f32 %v554, %v554
      %v587 = vmul.f32 %v555, %v555
      %v588 = vmul.f32 %v556, %v556
      %v589 = vmul.f32 %v557, %v557
      %v590 = vmul.f32 %v558, %v558
      %v591 = vmul.f32 %v559, %v559
      %v592 = vmul.f32 %v560, %v560
      %v593 = vmul.f32 %v561, %v561
      %v594 = vmul.f32 %v562, %v562
      %v595 = vadd.f32 %v563, %v564
      %v596 = vadd.f32 %v595, %v565
      %v597 = vadd.f32 %v596, %v566
      %v598 = vadd.f32 %v597, %v567
      %v599 = vadd.f32 %v598, %v568
      %v600 = vadd.f32 %v599, %v569
      %v601 = vadd.f32 %v600, %v570
      %v602 = vadd.f32 %v601, %v571
      %v603 = vadd.f32 %v602, %v572
      %v604 = vadd.f32 %v603, %v573
      %v605 = vadd.f32 %v604, %v574
      %v606 = vadd.f32 %v605, %v575
      %v607 = vadd.f32 %v606, %v576
      %v608 = vadd.f32 %v607, %v577
      %v609 = vadd.f32 %v608, %v578
      %v610 = vadd.f32 %v609, %v579
      %v611 = vadd.f32 %v610, %v580
      %v612 = vadd.f32 %v611, %v581
      %v613 = vadd.f32 %v612, %v582
      %v614 = vadd.f32 %v613, %v583
      %v615 = vadd.f32 %v614, %v584
      %v616 = vadd.f32 %v615, %v585
      %v617 = vadd.f32 %v616, %v586
      %v618 = vadd.f32 %v617, %v587
      %v619 = vadd.f32 %v618, %v588
      %v620 = vadd.f32 %v619, %v589
      %v621 = vadd.f32 %v620, %v590
      %v622 = vadd.f32 %v621, %v591
      %v623 = vadd.f32 %v622, %v592
      %v624 = vadd.f32 %v623, %v593
      %v625 = vadd.f32 %v624, %v594
      %v626 = vrot.slane %v625, 4
      %v627 = vadd.f32 %v625, %v626
      %v628 = vrot.slane %v627, 2
      %v629 = vadd.f32 %v627, %v628
      %v630 = vrot.slane %v629, 1
      %v631 = vadd.f32 %v629, %v630
      %632 = vmatprep.subr.mxu0 0.0
      %633 = vmatpush1.msra.mxu0 %v418
      %634 = vmatprep.subr.mxu0 0.0
      %635 = vmatpush1.msra.mxu0 %v417
      %636 = vmatprep.subr.mxu0 0.0
      %637 = vmatpush1.msra.mxu0 %v416
      %638 = vmatprep.subr.mxu0 0.0
      %639 = vmatpush1.msra.mxu0 %v415
      %640 = vmatprep.subr.mxu0 0.0
      %641 = vmatpush1.msra.mxu0 %v414
      %642 = vmatprep.subr.mxu0 0.0
      %643 = vmatpush1.msra.mxu0 %v413
      %644 = vmatprep.subr.mxu0 0.0
      %645 = vmatpush1.msra.mxu0 %v412
      %646 = vmatprep.subr.mxu0 0.0
      %647 = vmatpush1.msra.mxu0 %v411
      %648 = vmatprep.subr.mxu0 0.0
      %649 = vmatpush1.msra.mxu0 %v410
      %650 = vmatprep.subr.mxu0 0.0
      %651 = vmatpush1.msra.mxu0 %v409
      %652 = vmatprep.subr.mxu0 0.0
      %653 = vmatpush1.msra.mxu0 %v408
      %654 = vmatprep.subr.mxu0 0.0
      %655 = vmatpush1.msra.mxu0 %v407
      %656 = vmatprep.subr.mxu0 0.0
      %657 = vmatpush1.msra.mxu0 %v406
      %658 = vmatprep.subr.mxu0 0.0
      %659 = vmatpush1.msra.mxu0 %v405
      %660 = vmatprep.subr.mxu0 0.0
      %661 = vmatpush1.msra.mxu0 %v404
      %662 = vmatprep.subr.mxu0 0.0
      %663 = vmatpush1.msra.mxu0 %v403
      %664 = vmatprep.subr.mxu0 0.0
      %665 = vmatpush2.msra.mxu0 0.0
      %666 = vmatprep.subr.mxu0 0.0
      %667 = vmatpush2.msra.mxu0 0.0
      %668 = vmatprep.subr.mxu0 0.0
      %669 = vmatpush2.msra.mxu0 0.0
      %670 = vmatprep.subr.mxu0 0.0
      %671 = vmatpush2.msra.mxu0 0.0
      %672 = vmatprep.subr.mxu0 0.0
      %673 = vmatpush2.msra.mxu0 0.0
      %674 = vmatprep.subr.mxu0 0.0
      %675 = vmatpush2.msra.mxu0 0.0
      %676 = vmatprep.subr.mxu0 0.0
      %677 = vmatpush2.msra.mxu0 0.0
      %678 = vmatprep.subr.mxu0 0.0
      %679 = vmatpush2.msra.mxu0 0.0
      %680 = vmatprep.subr.mxu0 0.0
      %681 = vmatpush2.msra.mxu0 0.0
      %682 = vmatprep.subr.mxu0 0.0
      %683 = vmatpush2.msra.mxu0 0.0
      %684 = vmatprep.subr.mxu0 0.0
      %685 = vmatpush2.msra.mxu0 0.0
      %686 = vmatprep.subr.mxu0 0.0
      %687 = vmatpush2.msra.mxu0 0.0
      %688 = vmatprep.subr.mxu0 0.0
      %689 = vmatpush2.msra.mxu0 0.0
      %690 = vmatprep.subr.mxu0 0.0
      %691 = vmatpush2.msra.mxu0 0.0
      %692 = vmatprep.subr.mxu0 0.0
      %693 = vmatpush2.msra.mxu0 0.0
      %694 = vmatprep.subr.mxu0 0.0
      %695 = vmatpush2.msra.mxu0 0.0
      %696 = vmatprep.mubr.f32.mxu0 0.0
      %697 = vmatmul.mubr.f32.gmra.mxu0 %v631
      %v698 = vpop.f32.mrf.mxu0
      %v699 = vadd.f32 0.0, %v698
      %v700 = vpop.f32.mrf.mxu0
      %701 = vdwg.mxu0
      %v702 = vmul.f32 %v699, 0.0009765625
      %v703 = vadd.f32 %v702, 1e-06
      %v704 = vrsqrt.pop %v703
      %v705 = vlaneseq
      %v706 = vshrl.u32 %v705, 7
      %v707 = vsub.s32 0, %v706
      %v708 = vrot.slane %v704, %v707
      %v709 = vmul.f32 %v531, %v708
      %v710 = vmul.f32 %v532, %v708
      %v711 = vmul.f32 %v533, %v708
      %v712 = vmul.f32 %v534, %v708
      %v713 = vmul.f32 %v535, %v708
      %v714 = vmul.f32 %v536, %v708
      %v715 = vmul.f32 %v537, %v708
      %v716 = vmul.f32 %v538, %v708
      %v717 = vmul.f32 %v539, %v708
      %v718 = vmul.f32 %v540, %v708
      %v719 = vmul.f32 %v541, %v708
      %v720 = vmul.f32 %v542, %v708
      %v721 = vmul.f32 %v543, %v708
      %v722 = vmul.f32 %v544, %v708
      %v723 = vmul.f32 %v545, %v708
      %v724 = vmul.f32 %v546, %v708
      %v725 = vmul.f32 %v547, %v708
      %v726 = vmul.f32 %v548, %v708
      %v727 = vmul.f32 %v549, %v708
      %v728 = vmul.f32 %v550, %v708
      %v729 = vmul.f32 %v551, %v708
      %v730 = vmul.f32 %v552, %v708
      %v731 = vmul.f32 %v553, %v708
      %v732 = vmul.f32 %v554, %v708
      %v733 = vmul.f32 %v555, %v708
      %v734 = vmul.f32 %v556, %v708
      %v735 = vmul.f32 %v557, %v708
      %v736 = vmul.f32 %v558, %v708
      %v737 = vmul.f32 %v559, %v708
      %v738 = vmul.f32 %v560, %v708
      %v739 = vmul.f32 %v561, %v708
      %v740 = vmul.f32 %v562, %v708
      %v741 = vld [vmem:[%s2] sm:$0x1]
      %v743 = vlaneseq
      %v744 = vshrl.u32 %v743, 7
      %v745 = vsub.s32 0, %v744
      %v746 = vrot.slane %v741, %v745
      %v748 = vmul.f32 %v709, %v746
      %v749 = vmul.f32 %v710, %v746
      %v750 = vmul.f32 %v711, %v746
      %v751 = vmul.f32 %v712, %v746
      %v752 = vmul.f32 %v713, %v746
      %v753 = vmul.f32 %v714, %v746
      %v754 = vmul.f32 %v715, %v746
      %v755 = vmul.f32 %v716, %v746
      %v756 = vmul.f32 %v717, %v746
      %v757 = vmul.f32 %v718, %v746
      %v758 = vmul.f32 %v719, %v746
      %v759 = vmul.f32 %v720, %v746
      %v760 = vmul.f32 %v721, %v746
      %v761 = vmul.f32 %v722, %v746
      %v762 = vmul.f32 %v723, %v746
      %v763 = vmul.f32 %v724, %v746
      %v764 = vmul.f32 %v725, %v746
      %v765 = vmul.f32 %v726, %v746
      %v766 = vmul.f32 %v727, %v746
      %v767 = vmul.f32 %v728, %v746
      %v768 = vmul.f32 %v729, %v746
      %v769 = vmul.f32 %v730, %v746
      %v770 = vmul.f32 %v731, %v746
      %v771 = vmul.f32 %v732, %v746
      %v772 = vmul.f32 %v733, %v746
      %v773 = vmul.f32 %v734, %v746
      %v774 = vmul.f32 %v735, %v746
      %v775 = vmul.f32 %v736, %v746
      %v776 = vmul.f32 %v737, %v746
      %v777 = vmul.f32 %v738, %v746
      %v778 = vmul.f32 %v739, %v746
      %v779 = vmul.f32 %v740, %v746
      %v780 = vld [vmem:[%s3] sm:$0x1]
      %v782 = vlaneseq
      %v783 = vshrl.u32 %v782, 7
      %v784 = vsub.s32 0, %v783
      %v785 = vrot.slane %v780, %v784
      %v787 = vadd.f32 %v748, %v785
      %v788 = vadd.f32 %v749, %v785
      %v789 = vadd.f32 %v750, %v785
      %v790 = vadd.f32 %v751, %v785
      %v791 = vadd.f32 %v752, %v785
      %v792 = vadd.f32 %v753, %v785
      %v793 = vadd.f32 %v754, %v785
      %v794 = vadd.f32 %v755, %v785
      %v795 = vadd.f32 %v756, %v785
      %v796 = vadd.f32 %v757, %v785
      %v797 = vadd.f32 %v758, %v785
      %v798 = vadd.f32 %v759, %v785
      %v799 = vadd.f32 %v760, %v785
      %v800 = vadd.f32 %v761, %v785
      %v801 = vadd.f32 %v762, %v785
      %v802 = vadd.f32 %v763, %v785
      %v803 = vadd.f32 %v764, %v785
      %v804 = vadd.f32 %v765, %v785
      %v805 = vadd.f32 %v766, %v785
      %v806 = vadd.f32 %v767, %v785
      %v807 = vadd.f32 %v768, %v785
      %v808 = vadd.f32 %v769, %v785
      %v809 = vadd.f32 %v770, %v785
      %v810 = vadd.f32 %v771, %v785
      %v811 = vadd.f32 %v772, %v785
      %v812 = vadd.f32 %v773, %v785
      %v813 = vadd.f32 %v774, %v785
      %v814 = vadd.f32 %v775, %v785
      %v815 = vadd.f32 %v776, %v785
      %v816 = vadd.f32 %v777, %v785
      %v817 = vadd.f32 %v778, %v785
      %v818 = vadd.f32 %v779, %v785
      %v819 = vpack.c.bf16 %v788, %v787
      %v820 = vpack.c.bf16 %v790, %v789
      %v821 = vpack.c.bf16 %v792, %v791
      %v822 = vpack.c.bf16 %v794, %v793
      %v823 = vpack.c.bf16 %v796, %v795
      %v824 = vpack.c.bf16 %v798, %v797
      %v825 = vpack.c.bf16 %v800, %v799
      %v826 = vpack.c.bf16 %v802, %v801
      %v827 = vpack.c.bf16 %v804, %v803
      %v828 = vpack.c.bf16 %v806, %v805
      %v829 = vpack.c.bf16 %v808, %v807
      %v830 = vpack.c.bf16 %v810, %v809
      %v831 = vpack.c.bf16 %v812, %v811
      %v832 = vpack.c.bf16 %v814, %v813
      %v833 = vpack.c.bf16 %v816, %v815
      %v834 = vpack.c.bf16 %v818, %v817
      %v835 = vld [vmem:[%s4] sm:$0xff]
      %v836 = vld [vmem:[%s4 + $0x8] sm:$0xf]
      %v837 = vld [vmem:[%s4 + $0xc] sm:$0xff]
      %v838 = vld [vmem:[%s4 + $0x14] sm:$0xf]
      %v839 = vld [vmem:[%s4 + $0x18] sm:$0xff]
      %v840 = vld [vmem:[%s4 + $0x20] sm:$0xf]
      %v841 = vld [vmem:[%s4 + $0x24] sm:$0xff]
      %v842 = vld [vmem:[%s4 + $0x2c] sm:$0xf]
      %v843 = vld [vmem:[%s4 + $0x30] sm:$0xff]
      %v844 = vld [vmem:[%s4 + $0x38] sm:$0xf]
      %v845 = vld [vmem:[%s4 + $0x3c] sm:$0xff]
      %v846 = vld [vmem:[%s4 + $0x44] sm:$0xf]
      %v847 = vld [vmem:[%s4 + $0x48] sm:$0xff]
      %v848 = vld [vmem:[%s4 + $0x50] sm:$0xf]
      %v849 = vld [vmem:[%s4 + $0x54] sm:$0xff]
      %v850 = vld [vmem:[%s4 + $0x5c] sm:$0xf]
      %v851 = vld [vmem:[%s4 + $0x60] sm:$0xff]
      %v852 = vld [vmem:[%s4 + $0x68] sm:$0xf]
      %v853 = vld [vmem:[%s4 + $0x6c] sm:$0xff]
      %v854 = vld [vmem:[%s4 + $0x74] sm:$0xf]
      %v855 = vld [vmem:[%s4 + $0x78] sm:$0xff]
      %v856 = vld [vmem:[%s4 + $0x80] sm:$0xf]
      %v857 = vld [vmem:[%s4 + $0x84] sm:$0xff]
      %v858 = vld [vmem:[%s4 + $0x8c] sm:$0xf]
      %v859 = vld [vmem:[%s4 + $0x90] sm:$0xff]
      %v860 = vld [vmem:[%s4 + $0x98] sm:$0xf]
      %v861 = vld [vmem:[%s4 + $0x9c] sm:$0xff]
      %v862 = vld [vmem:[%s4 + $0xa4] sm:$0xf]
      %v863 = vld [vmem:[%s4 + $0xa8] sm:$0xff]
      %v864 = vld [vmem:[%s4 + $0xb0] sm:$0xf]
      %v865 = vld [vmem:[%s4 + $0xb4] sm:$0xff]
      %v866 = vld [vmem:[%s4 + $0xbc] sm:$0xf]
      %v867 = vld [vmem:[%s5] sm:$0x7]
      %v869 = vlaneseq
      %v870 = vshrl.u32 %v869, 7
      %v871 = vsub.s32 0, %v870
      %v872 = vrot.slane %v867, %v871
      %v873 = vlaneseq
      %v874 = vshrl.u32 %v873, 7
      %v875 = vsub.s32 1, %v874
      %v876 = vrot.slane %v867, %v875
      %v877 = vlaneseq
      %v878 = vshrl.u32 %v877, 7
      %v879 = vsub.s32 2, %v878
      %v880 = vrot.slane %v867, %v879
      %v916 = vunpack.c.l.b16 %v835
      %v917 = vunpack.c.h.b16 %v835
      %v918 = vunpack.c.l.b16 %v836
      %v919 = vunpack.c.l.b16 %v837
      %v920 = vunpack.c.h.b16 %v837
      %v921 = vunpack.c.l.b16 %v838
      %v922 = vunpack.c.l.b16 %v839
      %v923 = vunpack.c.h.b16 %v839
      %v924 = vunpack.c.l.b16 %v840
      %v925 = vunpack.c.l.b16 %v841
      %v926 = vunpack.c.h.b16 %v841
      %v927 = vunpack.c.l.b16 %v842
      %v928 = vunpack.c.l.b16 %v843
      %v929 = vunpack.c.h.b16 %v843
      %v930 = vunpack.c.l.b16 %v844
      %v931 = vunpack.c.l.b16 %v845
      %v932 = vunpack.c.h.b16 %v845
      %v933 = vunpack.c.l.b16 %v846
      %v934 = vunpack.c.l.b16 %v847
      %v935 = vunpack.c.h.b16 %v847
      %v936 = vunpack.c.l.b16 %v848
      %v937 = vunpack.c.l.b16 %v849
      %v938 = vunpack.c.h.b16 %v849
      %v939 = vunpack.c.l.b16 %v850
      %v940 = vunpack.c.l.b16 %v851
      %v941 = vunpack.c.h.b16 %v851
      %v942 = vunpack.c.l.b16 %v852
      %v943 = vunpack.c.l.b16 %v853
      %v944 = vunpack.c.h.b16 %v853
      %v945 = vunpack.c.l.b16 %v854
      %v946 = vunpack.c.l.b16 %v855
      %v947 = vunpack.c.h.b16 %v855
      %v948 = vunpack.c.l.b16 %v856
      %v949 = vunpack.c.l.b16 %v857
      %v950 = vunpack.c.h.b16 %v857
      %v951 = vunpack.c.l.b16 %v858
      %v952 = vunpack.c.l.b16 %v859
      %v953 = vunpack.c.h.b16 %v859
      %v954 = vunpack.c.l.b16 %v860
      %v955 = vunpack.c.l.b16 %v861
      %v956 = vunpack.c.h.b16 %v861
      %v957 = vunpack.c.l.b16 %v862
      %v958 = vunpack.c.l.b16 %v863
      %v959 = vunpack.c.h.b16 %v863
      %v960 = vunpack.c.l.b16 %v864
      %v961 = vunpack.c.l.b16 %v865
      %v962 = vunpack.c.h.b16 %v865
      %v963 = vunpack.c.l.b16 %v866
      %v964 = vpack.c.b16 %v919, %v916
      %v965 = vpack.c.b16 %v920, %v917
      %v966 = vpack.c.b16 %v921, %v918
      %v967 = vpack.c.b16 %v925, %v922
      %v968 = vpack.c.b16 %v926, %v923
      %v969 = vpack.c.b16 %v927, %v924
      %v970 = vpack.c.b16 %v931, %v928
      %v971 = vpack.c.b16 %v932, %v929
      %v972 = vpack.c.b16 %v933, %v930
      %v973 = vpack.c.b16 %v937, %v934
      %v974 = vpack.c.b16 %v938, %v935
      %v975 = vpack.c.b16 %v939, %v936
      %v976 = vpack.c.b16 %v943, %v940
      %v977 = vpack.c.b16 %v944, %v941
      %v978 = vpack.c.b16 %v945, %v942
      %v979 = vpack.c.b16 %v949, %v946
      %v980 = vpack.c.b16 %v950, %v947
      %v981 = vpack.c.b16 %v951, %v948
      %v982 = vpack.c.b16 %v955, %v952
      %v983 = vpack.c.b16 %v956, %v953
      %v984 = vpack.c.b16 %v957, %v954
      %v985 = vpack.c.b16 %v961, %v958
      %v986 = vpack.c.b16 %v962, %v959
      %v987 = vpack.c.b16 %v963, %v960
      %1012 = vmatprep.subr.bf16.mxu0 %v986
      %1013 = vmatpush1.bf16.msra.mxu0 %v985
      %1014 = vmatprep.subr.bf16.mxu0 %v983
      %1015 = vmatpush1.bf16.msra.mxu0 %v982
      %1016 = vmatprep.subr.bf16.mxu0 %v980
      %1017 = vmatpush1.bf16.msra.mxu0 %v979
      %1018 = vmatprep.subr.bf16.mxu0 %v977
      %1019 = vmatpush1.bf16.msra.mxu0 %v976
      %1020 = vmatprep.subr.bf16.mxu0 %v974
      %1021 = vmatpush1.bf16.msra.mxu0 %v973
      %1022 = vmatprep.subr.bf16.mxu0 %v971
      %1023 = vmatpush1.bf16.msra.mxu0 %v970
      %1024 = vmatprep.subr.bf16.mxu0 %v968
      %1025 = vmatpush1.bf16.msra.mxu0 %v967
      %1026 = vmatprep.subr.bf16.mxu0 %v965
      %1027 = vmatpush1.bf16.msra.mxu0 %v964
      %1028 = vmatprep.subr.bf16.mxu0 0
      %1029 = vmatpush2.bf16.msra.mxu0 0
      %1030 = vmatprep.subr.bf16.mxu0 0
      %1031 = vmatpush2.bf16.msra.mxu0 0
      %1032 = vmatprep.subr.bf16.mxu0 0
      %1033 = vmatpush2.bf16.msra.mxu0 0
      %1034 = vmatprep.subr.bf16.mxu0 0
      %1035 = vmatpush2.bf16.msra.mxu0 0
      %1036 = vmatprep.subr.bf16.mxu0 0
      %1037 = vmatpush2.bf16.msra.mxu0 0
      %1038 = vmatprep.subr.bf16.mxu0 0
      %1039 = vmatpush2.bf16.msra.mxu0 0
      %1040 = vmatprep.subr.bf16.mxu0 0
      %1041 = vmatpush2.bf16.msra.mxu0 0
      %1042 = vmatprep.subr.bf16.mxu0 0
      %1043 = vmatpush2.bf16.msra.mxu0 0
      %1044 = vmatprep.mubr.bf16.mxu0 0
      %1045 = vmatmul.mubr.bf16.gmra.mxu0 %v819
      %v1046 = vpop.f32.mrf.mxu0
      %v1047 = vadd.f32 %v872, %v1046
      %v1048 = vpop.f32.mrf.mxu0
      %v1049 = vadd.f32 %v876, %v1048
      %v1050 = vpop.f32.mrf.mxu0
      %v1051 = vadd.f32 %v872, %v1050
      %v1052 = vpop.f32.mrf.mxu0
      %v1053 = vadd.f32 %v876, %v1052
      %1054 = vmatprep.mubr.bf16.mxu0 0
      %1055 = vmatmul.mubr.bf16.gmra.mxu0 %v820
      %v1056 = vpop.f32.mrf.mxu0
      %v1057 = vadd.f32 %v872, %v1056
      %v1058 = vpop.f32.mrf.mxu0
      %v1059 = vadd.f32 %v876, %v1058
      %v1060 = vpop.f32.mrf.mxu0
      %v1061 = vadd.f32 %v872, %v1060
      %v1062 = vpop.f32.mrf.mxu0
      %v1063 = vadd.f32 %v876, %v1062
      %1064 = vmatprep.mubr.bf16.mxu0 0
      %1065 = vmatmul.mubr.bf16.gmra.mxu0 %v821
      %v1066 = vpop.f32.mrf.mxu0
      %v1067 = vadd.f32 %v872, %v1066
      %v1068 = vpop.f32.mrf.mxu0
      %v1069 = vadd.f32 %v876, %v1068
      %v1070 = vpop.f32.mrf.mxu0
      %v1071 = vadd.f32 %v872, %v1070
      %v1072 = vpop.f32.mrf.mxu0
      %v1073 = vadd.f32 %v876, %v1072
      %1074 = vmatprep.mubr.bf16.mxu0 0
      %1075 = vmatmul.mubr.bf16.gmra.mxu0 %v822
      %v1076 = vpop.f32.mrf.mxu0
      %v1077 = vadd.f32 %v872, %v1076
      %v1078 = vpop.f32.mrf.mxu0
      %v1079 = vadd.f32 %v876, %v1078
      %v1080 = vpop.f32.mrf.mxu0
      %v1081 = vadd.f32 %v872, %v1080
      %v1082 = vpop.f32.mrf.mxu0
      %v1083 = vadd.f32 %v876, %v1082
      %1084 = vmatprep.mubr.bf16.mxu0 0
      %1085 = vmatmul.mubr.bf16.gmra.mxu0 %v823
      %v1086 = vpop.f32.mrf.mxu0
      %v1087 = vadd.f32 %v872, %v1086
      %v1088 = vpop.f32.mrf.mxu0
      %v1089 = vadd.f32 %v876, %v1088
      %v1090 = vpop.f32.mrf.mxu0
      %v1091 = vadd.f32 %v872, %v1090
      %v1092 = vpop.f32.mrf.mxu0
      %v1093 = vadd.f32 %v876, %v1092
      %1094 = vmatprep.mubr.bf16.mxu0 0
      %1095 = vmatmul.mubr.bf16.gmra.mxu0 %v824
      %v1096 = vpop.f32.mrf.mxu0
      %v1097 = vadd.f32 %v872, %v1096
      %v1098 = vpop.f32.mrf.mxu0
      %v1099 = vadd.f32 %v876, %v1098
      %v1100 = vpop.f32.mrf.mxu0
      %v1101 = vadd.f32 %v872, %v1100
      %v1102 = vpop.f32.mrf.mxu0
      %v1103 = vadd.f32 %v876, %v1102
      %1104 = vmatprep.mubr.bf16.mxu0 0
      %1105 = vmatmul.mubr.bf16.gmra.mxu0 %v825
      %v1106 = vpop.f32.mrf.mxu0
      %v1107 = vadd.f32 %v872, %v1106
      %v1108 = vpop.f32.mrf.mxu0
      %v1109 = vadd.f32 %v876, %v1108
      %v1110 = vpop.f32.mrf.mxu0
      %v1111 = vadd.f32 %v872, %v1110
      %v1112 = vpop.f32.mrf.mxu0
      %v1113 = vadd.f32 %v876, %v1112
      %1114 = vmatprep.mubr.bf16.mxu0 0
      %1115 = vmatmul.mubr.bf16.gmra.mxu0 %v826
      %v1116 = vpop.f32.mrf.mxu0
      %v1117 = vadd.f32 %v872, %v1116
      %v1118 = vpop.f32.mrf.mxu0
      %v1119 = vadd.f32 %v876, %v1118
      %v1120 = vpop.f32.mrf.mxu0
      %v1121 = vadd.f32 %v872, %v1120
      %v1122 = vpop.f32.mrf.mxu0
      %v1123 = vadd.f32 %v876, %v1122
      %1124 = vmatprep.mubr.bf16.mxu0 0
      %1125 = vmatmul.mubr.bf16.gmra.mxu0 %v827
      %v1126 = vpop.f32.mrf.mxu0
      %v1127 = vadd.f32 %v872, %v1126
      %v1128 = vpop.f32.mrf.mxu0
      %v1129 = vadd.f32 %v876, %v1128
      %v1130 = vpop.f32.mrf.mxu0
      %v1131 = vadd.f32 %v872, %v1130
      %v1132 = vpop.f32.mrf.mxu0
      %v1133 = vadd.f32 %v876, %v1132
      %1134 = vmatprep.mubr.bf16.mxu0 0
      %1135 = vmatmul.mubr.bf16.gmra.mxu0 %v828
      %v1136 = vpop.f32.mrf.mxu0
      %v1137 = vadd.f32 %v872, %v1136
      %v1138 = vpop.f32.mrf.mxu0
      %v1139 = vadd.f32 %v876, %v1138
      %v1140 = vpop.f32.mrf.mxu0
      %v1141 = vadd.f32 %v872, %v1140
      %v1142 = vpop.f32.mrf.mxu0
      %v1143 = vadd.f32 %v876, %v1142
      %1144 = vmatprep.mubr.bf16.mxu0 0
      %1145 = vmatmul.mubr.bf16.gmra.mxu0 %v829
      %v1146 = vpop.f32.mrf.mxu0
      %v1147 = vadd.f32 %v872, %v1146
      %v1148 = vpop.f32.mrf.mxu0
      %v1149 = vadd.f32 %v876, %v1148
      %v1150 = vpop.f32.mrf.mxu0
      %v1151 = vadd.f32 %v872, %v1150
      %v1152 = vpop.f32.mrf.mxu0
      %v1153 = vadd.f32 %v876, %v1152
      %1154 = vmatprep.mubr.bf16.mxu0 0
      %1155 = vmatmul.mubr.bf16.gmra.mxu0 %v830
      %v1156 = vpop.f32.mrf.mxu0
      %v1157 = vadd.f32 %v872, %v1156
      %v1158 = vpop.f32.mrf.mxu0
      %v1159 = vadd.f32 %v876, %v1158
      %v1160 = vpop.f32.mrf.mxu0
      %v1161 = vadd.f32 %v872, %v1160
      %v1162 = vpop.f32.mrf.mxu0
      %v1163 = vadd.f32 %v876, %v1162
      %1164 = vmatprep.mubr.bf16.mxu0 0
      %1165 = vmatmul.mubr.bf16.gmra.mxu0 %v831
      %v1166 = vpop.f32.mrf.mxu0
      %v1167 = vadd.f32 %v872, %v1166
      %v1168 = vpop.f32.mrf.mxu0
      %v1169 = vadd.f32 %v876, %v1168
      %v1170 = vpop.f32.mrf.mxu0
      %v1171 = vadd.f32 %v872, %v1170
      %v1172 = vpop.f32.mrf.mxu0
      %v1173 = vadd.f32 %v876, %v1172
      %1174 = vmatprep.mubr.bf16.mxu0 0
      %1175 = vmatmul.mubr.bf16.gmra.mxu0 %v832
      %v1176 = vpop.f32.mrf.mxu0
      %v1177 = vadd.f32 %v872, %v1176
      %v1178 = vpop.f32.mrf.mxu0
      %v1179 = vadd.f32 %v876, %v1178
      %v1180 = vpop.f32.mrf.mxu0
      %v1181 = vadd.f32 %v872, %v1180
      %v1182 = vpop.f32.mrf.mxu0
      %v1183 = vadd.f32 %v876, %v1182
      %1184 = vmatprep.mubr.bf16.mxu0 0
      %1185 = vmatmul.mubr.bf16.gmra.mxu0 %v833
      %v1186 = vpop.f32.mrf.mxu0
      %v1187 = vadd.f32 %v872, %v1186
      %v1188 = vpop.f32.mrf.mxu0
      %v1189 = vadd.f32 %v876, %v1188
      %v1190 = vpop.f32.mrf.mxu0
      %v1191 = vadd.f32 %v872, %v1190
      %v1192 = vpop.f32.mrf.mxu0
      %v1193 = vadd.f32 %v876, %v1192
      %1194 = vmatprep.mubr.bf16.mxu0 0
      %1195 = vmatmul.mubr.bf16.gmra.mxu0 %v834
      %v1196 = vpop.f32.mrf.mxu0
      %v1197 = vadd.f32 %v872, %v1196
      %v1198 = vpop.f32.mrf.mxu0
      %v1199 = vadd.f32 %v876, %v1198
      %v1200 = vpop.f32.mrf.mxu0
      %v1201 = vadd.f32 %v872, %v1200
      %v1202 = vpop.f32.mrf.mxu0
      %v1203 = vadd.f32 %v876, %v1202
      %1204 = vdwg.mxu0
      %1205 = vmatprep.subr.bf16.mxu0 0
      %1206 = vmatpush1.bf16.msra.mxu0 %v987
      %1207 = vmatprep.subr.bf16.mxu0 0
      %1208 = vmatpush1.bf16.msra.mxu0 %v984
      %1209 = vmatprep.subr.bf16.mxu0 0
      %1210 = vmatpush1.bf16.msra.mxu0 %v981
      %1211 = vmatprep.subr.bf16.mxu0 0
      %1212 = vmatpush1.bf16.msra.mxu0 %v978
      %1213 = vmatprep.subr.bf16.mxu0 0
      %1214 = vmatpush1.bf16.msra.mxu0 %v975
      %1215 = vmatprep.subr.bf16.mxu0 0
      %1216 = vmatpush1.bf16.msra.mxu0 %v972
      %1217 = vmatprep.subr.bf16.mxu0 0
      %1218 = vmatpush1.bf16.msra.mxu0 %v969
      %1219 = vmatprep.subr.bf16.mxu0 0
      %1220 = vmatpush1.bf16.msra.mxu0 %v966
      %1221 = vmatprep.subr.bf16.mxu0 0
      %1222 = vmatpush2.bf16.msra.mxu0 0
      %1223 = vmatprep.subr.bf16.mxu0 0
      %1224 = vmatpush2.bf16.msra.mxu0 0
      %1225 = vmatprep.subr.bf16.mxu0 0
      %1226 = vmatpush2.bf16.msra.mxu0 0
      %1227 = vmatprep.subr.bf16.mxu0 0
      %1228 = vmatpush2.bf16.msra.mxu0 0
      %1229 = vmatprep.subr.bf16.mxu0 0
      %1230 = vmatpush2.bf16.msra.mxu0 0
      %1231 = vmatprep.subr.bf16.mxu0 0
      %1232 = vmatpush2.bf16.msra.mxu0 0
      %1233 = vmatprep.subr.bf16.mxu0 0
      %1234 = vmatpush2.bf16.msra.mxu0 0
      %1235 = vmatprep.subr.bf16.mxu0 0
      %1236 = vmatpush2.bf16.msra.mxu0 0
      %1237 = vmatprep.mubr.bf16.mxu0 0
      %1238 = vmatmul.mubr.bf16.gmra.mxu0 %v819
      %v1239 = vpop.f32.mrf.mxu0
      %v1240 = vadd.f32 %v880, %v1239
      %v1241 = vpop.f32.mrf.mxu0
      %v1242 = vpop.f32.mrf.mxu0
      %v1243 = vadd.f32 %v880, %v1242
      %v1244 = vpop.f32.mrf.mxu0
      %1245 = vmatprep.mubr.bf16.mxu0 0
      %1246 = vmatmul.mubr.bf16.gmra.mxu0 %v820
      %v1247 = vpop.f32.mrf.mxu0
      %v1248 = vadd.f32 %v880, %v1247
      %v1249 = vpop.f32.mrf.mxu0
      %v1250 = vpop.f32.mrf.mxu0
      %v1251 = vadd.f32 %v880, %v1250
      %v1252 = vpop.f32.mrf.mxu0
      %1253 = vmatprep.mubr.bf16.mxu0 0
      %1254 = vmatmul.mubr.bf16.gmra.mxu0 %v821
      %v1255 = vpop.f32.mrf.mxu0
      %v1256 = vadd.f32 %v880, %v1255
      %v1257 = vpop.f32.mrf.mxu0
      %v1258 = vpop.f32.mrf.mxu0
      %v1259 = vadd.f32 %v880, %v1258
      %v1260 = vpop.f32.mrf.mxu0
      %1261 = vmatprep.mubr.bf16.mxu0 0
      %1262 = vmatmul.mubr.bf16.gmra.mxu0 %v822
      %v1263 = vpop.f32.mrf.mxu0
      %v1264 = vadd.f32 %v880, %v1263
      %v1265 = vpop.f32.mrf.mxu0
      %v1266 = vpop.f32.mrf.mxu0
      %v1267 = vadd.f32 %v880, %v1266
      %v1268 = vpop.f32.mrf.mxu0
      %1269 = vmatprep.mubr.bf16.mxu0 0
      %1270 = vmatmul.mubr.bf16.gmra.mxu0 %v823
      %v1271 = vpop.f32.mrf.mxu0
      %v1272 = vadd.f32 %v880, %v1271
      %v1273 = vpop.f32.mrf.mxu0
      %v1274 = vpop.f32.mrf.mxu0
      %v1275 = vadd.f32 %v880, %v1274
      %v1276 = vpop.f32.mrf.mxu0
      %1277 = vmatprep.mubr.bf16.mxu0 0
      %1278 = vmatmul.mubr.bf16.gmra.mxu0 %v824
      %v1279 = vpop.f32.mrf.mxu0
      %v1280 = vadd.f32 %v880, %v1279
      %v1281 = vpop.f32.mrf.mxu0
      %v1282 = vpop.f32.mrf.mxu0
      %v1283 = vadd.f32 %v880, %v1282
      %v1284 = vpop.f32.mrf.mxu0
      %1285 = vmatprep.mubr.bf16.mxu0 0
      %1286 = vmatmul.mubr.bf16.gmra.mxu0 %v825
      %v1287 = vpop.f32.mrf.mxu0
      %v1288 = vadd.f32 %v880, %v1287
      %v1289 = vpop.f32.mrf.mxu0
      %v1290 = vpop.f32.mrf.mxu0
      %v1291 = vadd.f32 %v880, %v1290
      %v1292 = vpop.f32.mrf.mxu0
      %1293 = vmatprep.mubr.bf16.mxu0 0
      %1294 = vmatmul.mubr.bf16.gmra.mxu0 %v826
      %v1295 = vpop.f32.mrf.mxu0
      %v1296 = vadd.f32 %v880, %v1295
      %v1297 = vpop.f32.mrf.mxu0
      %v1298 = vpop.f32.mrf.mxu0
      %v1299 = vadd.f32 %v880, %v1298
      %v1300 = vpop.f32.mrf.mxu0
      %1301 = vmatprep.mubr.bf16.mxu0 0
      %1302 = vmatmul.mubr.bf16.gmra.mxu0 %v827
      %v1303 = vpop.f32.mrf.mxu0
      %v1304 = vadd.f32 %v880, %v1303
      %v1305 = vpop.f32.mrf.mxu0
      %v1306 = vpop.f32.mrf.mxu0
      %v1307 = vadd.f32 %v880, %v1306
      %v1308 = vpop.f32.mrf.mxu0
      %1309 = vmatprep.mubr.bf16.mxu0 0
      %1310 = vmatmul.mubr.bf16.gmra.mxu0 %v828
      %v1311 = vpop.f32.mrf.mxu0
      %v1312 = vadd.f32 %v880, %v1311
      %v1313 = vpop.f32.mrf.mxu0
      %v1314 = vpop.f32.mrf.mxu0
      %v1315 = vadd.f32 %v880, %v1314
      %v1316 = vpop.f32.mrf.mxu0
      %1317 = vmatprep.mubr.bf16.mxu0 0
      %1318 = vmatmul.mubr.bf16.gmra.mxu0 %v829
      %v1319 = vpop.f32.mrf.mxu0
      %v1320 = vadd.f32 %v880, %v1319
      %v1321 = vpop.f32.mrf.mxu0
      %v1322 = vpop.f32.mrf.mxu0
      %v1323 = vadd.f32 %v880, %v1322
      %v1324 = vpop.f32.mrf.mxu0
      %1325 = vmatprep.mubr.bf16.mxu0 0
      %1326 = vmatmul.mubr.bf16.gmra.mxu0 %v830
      %v1327 = vpop.f32.mrf.mxu0
      %v1328 = vadd.f32 %v880, %v1327
      %v1329 = vpop.f32.mrf.mxu0
      %v1330 = vpop.f32.mrf.mxu0
      %v1331 = vadd.f32 %v880, %v1330
      %v1332 = vpop.f32.mrf.mxu0
      %1333 = vmatprep.mubr.bf16.mxu0 0
      %1334 = vmatmul.mubr.bf16.gmra.mxu0 %v831
      %v1335 = vpop.f32.mrf.mxu0
      %v1336 = vadd.f32 %v880, %v1335
      %v1337 = vpop.f32.mrf.mxu0
      %v1338 = vpop.f32.mrf.mxu0
      %v1339 = vadd.f32 %v880, %v1338
      %v1340 = vpop.f32.mrf.mxu0
      %1341 = vmatprep.mubr.bf16.mxu0 0
      %1342 = vmatmul.mubr.bf16.gmra.mxu0 %v832
      %v1343 = vpop.f32.mrf.mxu0
      %v1344 = vadd.f32 %v880, %v1343
      %v1345 = vpop.f32.mrf.mxu0
      %v1346 = vpop.f32.mrf.mxu0
      %v1347 = vadd.f32 %v880, %v1346
      %v1348 = vpop.f32.mrf.mxu0
      %1349 = vmatprep.mubr.bf16.mxu0 0
      %1350 = vmatmul.mubr.bf16.gmra.mxu0 %v833
      %v1351 = vpop.f32.mrf.mxu0
      %v1352 = vadd.f32 %v880, %v1351
      %v1353 = vpop.f32.mrf.mxu0
      %v1354 = vpop.f32.mrf.mxu0
      %v1355 = vadd.f32 %v880, %v1354
      %v1356 = vpop.f32.mrf.mxu0
      %1357 = vmatprep.mubr.bf16.mxu0 0
      %1358 = vmatmul.mubr.bf16.gmra.mxu0 %v834
      %v1359 = vpop.f32.mrf.mxu0
      %v1360 = vadd.f32 %v880, %v1359
      %v1361 = vpop.f32.mrf.mxu0
      %v1362 = vpop.f32.mrf.mxu0
      %v1363 = vadd.f32 %v880, %v1362
      %v1364 = vpop.f32.mrf.mxu0
      %1365 = vdwg.mxu0
      %v1366 = vpack.c.bf16 %v1051, %v1047
      %v1367 = vpack.c.bf16 %v1061, %v1057
      %v1368 = vpack.c.bf16 %v1071, %v1067
      %v1369 = vpack.c.bf16 %v1081, %v1077
      %v1370 = vpack.c.bf16 %v1091, %v1087
      %v1371 = vpack.c.bf16 %v1101, %v1097
      %v1372 = vpack.c.bf16 %v1111, %v1107
      %v1373 = vpack.c.bf16 %v1121, %v1117
      %v1374 = vpack.c.bf16 %v1131, %v1127
      %v1375 = vpack.c.bf16 %v1141, %v1137
      %v1376 = vpack.c.bf16 %v1151, %v1147
      %v1377 = vpack.c.bf16 %v1161, %v1157
      %v1378 = vpack.c.bf16 %v1171, %v1167
      %v1379 = vpack.c.bf16 %v1181, %v1177
      %v1380 = vpack.c.bf16 %v1191, %v1187
      %v1381 = vpack.c.bf16 %v1201, %v1197
      %v1382 = vpack.c.bf16 %v1053, %v1049
      %v1383 = vpack.c.bf16 %v1063, %v1059
      %v1384 = vpack.c.bf16 %v1073, %v1069
      %v1385 = vpack.c.bf16 %v1083, %v1079
      %v1386 = vpack.c.bf16 %v1093, %v1089
      %v1387 = vpack.c.bf16 %v1103, %v1099
      %v1388 = vpack.c.bf16 %v1113, %v1109
      %v1389 = vpack.c.bf16 %v1123, %v1119
      %v1390 = vpack.c.bf16 %v1133, %v1129
      %v1391 = vpack.c.bf16 %v1143, %v1139
      %v1392 = vpack.c.bf16 %v1153, %v1149
      %v1393 = vpack.c.bf16 %v1163, %v1159
      %v1394 = vpack.c.bf16 %v1173, %v1169
      %v1395 = vpack.c.bf16 %v1183, %v1179
      %v1396 = vpack.c.bf16 %v1193, %v1189
      %v1397 = vpack.c.bf16 %v1203, %v1199
      %v1398 = vpack.c.bf16 %v1243, %v1240
      %v1399 = vpack.c.bf16 %v1251, %v1248
      %v1400 = vpack.c.bf16 %v1259, %v1256
      %v1401 = vpack.c.bf16 %v1267, %v1264
      %v1402 = vpack.c.bf16 %v1275, %v1272
      %v1403 = vpack.c.bf16 %v1283, %v1280
      %v1404 = vpack.c.bf16 %v1291, %v1288
      %v1405 = vpack.c.bf16 %v1299, %v1296
      %v1406 = vpack.c.bf16 %v1307, %v1304
      %v1407 = vpack.c.bf16 %v1315, %v1312
      %v1408 = vpack.c.bf16 %v1323, %v1320
      %v1409 = vpack.c.bf16 %v1331, %v1328
      %v1410 = vpack.c.bf16 %v1339, %v1336
      %v1411 = vpack.c.bf16 %v1347, %v1344
      %v1412 = vpack.c.bf16 %v1355, %v1352
      %v1413 = vpack.c.bf16 %v1363, %v1360
      %1414 = vmatprep.subr.bf16.mxu0 0
      %1415 = vmatpush1.bf16.xpose.msra.mxu0 %v1389
      %1416 = vmatprep.subr.bf16.mxu0 0
      %1417 = vmatpush1.bf16.xpose.msra.mxu0 %v1388
      %1418 = vmatprep.subr.bf16.mxu0 0
      %1419 = vmatpush1.bf16.xpose.msra.mxu0 %v1387
      %1420 = vmatprep.subr.bf16.mxu0 0
      %1421 = vmatpush1.bf16.xpose.msra.mxu0 %v1386
      %1422 = vmatprep.subr.bf16.mxu0 0
      %1423 = vmatpush1.bf16.xpose.msra.mxu0 %v1385
      %1424 = vmatprep.subr.bf16.mxu0 0
      %1425 = vmatpush1.bf16.xpose.msra.mxu0 %v1384
      %1426 = vmatprep.subr.bf16.mxu0 0
      %1427 = vmatpush1.bf16.xpose.msra.mxu0 %v1383
      %1428 = vmatprep.subr.bf16.mxu0 0
      %1429 = vmatpush1.bf16.xpose.msra.mxu0 %v1382
      %1430 = vmatprep.subr.bf16.mxu0 0
      %1431 = vmatpush2.bf16.xpose.msra.mxu0 %v1397
      %1432 = vmatprep.subr.bf16.mxu0 0
      %1433 = vmatpush2.bf16.xpose.msra.mxu0 %v1396
      %1434 = vmatprep.subr.bf16.mxu0 0
      %1435 = vmatpush2.bf16.xpose.msra.mxu0 %v1395
      %1436 = vmatprep.subr.bf16.mxu0 0
      %1437 = vmatpush2.bf16.xpose.msra.mxu0 %v1394
      %1438 = vmatprep.subr.bf16.mxu0 0
      %1439 = vmatpush2.bf16.xpose.msra.mxu0 %v1393
      %1440 = vmatprep.subr.bf16.mxu0 0
      %1441 = vmatpush2.bf16.xpose.msra.mxu0 %v1392
      %1442 = vmatprep.subr.bf16.mxu0 0
      %1443 = vmatpush2.bf16.xpose.msra.mxu0 %v1391
      %1444 = vmatprep.subr.bf16.mxu0 0
      %1445 = vmatpush2.bf16.xpose.msra.mxu0 %v1390
      %1446 = vmatprep.mubr.bf16.mxu0 0
      %1447 = vmatmul.mubr.bf16.gmra.mxu0 %v1366
      %v1448 = vpop.f32.mrf.mxu0
      %v1449 = vadd.f32 0.0, %v1448
      %v1450 = vpop.f32.mrf.mxu0
      %v1451 = vadd.f32 0.0, %v1450
      %v1452 = vpop.f32.mrf.mxu0
      %v1453 = vadd.f32 0.0, %v1452
      %v1454 = vpop.f32.mrf.mxu0
      %v1455 = vadd.f32 0.0, %v1454
      %1456 = vmatprep.mubr.bf16.mxu0 0
      %1457 = vmatmul.mubr.bf16.gmra.mxu0 %v1367
      %v1458 = vpop.f32.mrf.mxu0
      %v1459 = vadd.f32 0.0, %v1458
      %v1460 = vpop.f32.mrf.mxu0
      %v1461 = vadd.f32 0.0, %v1460
      %v1462 = vpop.f32.mrf.mxu0
      %v1463 = vadd.f32 0.0, %v1462
      %v1464 = vpop.f32.mrf.mxu0
      %v1465 = vadd.f32 0.0, %v1464
      %1466 = vmatprep.mubr.bf16.mxu0 0
      %1467 = vmatmul.mubr.bf16.gmra.mxu0 %v1368
      %v1468 = vpop.f32.mrf.mxu0
      %v1469 = vadd.f32 0.0, %v1468
      %v1470 = vpop.f32.mrf.mxu0
      %v1471 = vadd.f32 0.0, %v1470
      %v1472 = vpop.f32.mrf.mxu0
      %v1473 = vadd.f32 0.0, %v1472
      %v1474 = vpop.f32.mrf.mxu0
      %v1475 = vadd.f32 0.0, %v1474
      %1476 = vmatprep.mubr.bf16.mxu0 0
      %1477 = vmatmul.mubr.bf16.gmra.mxu0 %v1369
      %v1478 = vpop.f32.mrf.mxu0
      %v1479 = vadd.f32 0.0, %v1478
      %v1480 = vpop.f32.mrf.mxu0
      %v1481 = vadd.f32 0.0, %v1480
      %v1482 = vpop.f32.mrf.mxu0
      %v1483 = vadd.f32 0.0, %v1482
      %v1484 = vpop.f32.mrf.mxu0
      %v1485 = vadd.f32 0.0, %v1484
      %1486 = vmatprep.mubr.bf16.mxu0 0
      %1487 = vmatmul.mubr.bf16.gmra.mxu0 %v1370
      %v1488 = vpop.f32.mrf.mxu0
      %v1489 = vadd.f32 0.0, %v1488
      %v1490 = vpop.f32.mrf.mxu0
      %v1491 = vadd.f32 0.0, %v1490
      %v1492 = vpop.f32.mrf.mxu0
      %v1493 = vadd.f32 0.0, %v1492
      %v1494 = vpop.f32.mrf.mxu0
      %v1495 = vadd.f32 0.0, %v1494
      %1496 = vmatprep.mubr.bf16.mxu0 0
      %1497 = vmatmul.mubr.bf16.gmra.mxu0 %v1371
      %v1498 = vpop.f32.mrf.mxu0
      %v1499 = vadd.f32 0.0, %v1498
      %v1500 = vpop.f32.mrf.mxu0
      %v1501 = vadd.f32 0.0, %v1500
      %v1502 = vpop.f32.mrf.mxu0
      %v1503 = vadd.f32 0.0, %v1502
      %v1504 = vpop.f32.mrf.mxu0
      %v1505 = vadd.f32 0.0, %v1504
      %1506 = vmatprep.mubr.bf16.mxu0 0
      %1507 = vmatmul.mubr.bf16.gmra.mxu0 %v1372
      %v1508 = vpop.f32.mrf.mxu0
      %v1509 = vadd.f32 0.0, %v1508
      %v1510 = vpop.f32.mrf.mxu0
      %v1511 = vadd.f32 0.0, %v1510
      %v1512 = vpop.f32.mrf.mxu0
      %v1513 = vadd.f32 0.0, %v1512
      %v1514 = vpop.f32.mrf.mxu0
      %v1515 = vadd.f32 0.0, %v1514
      %1516 = vmatprep.mubr.bf16.mxu0 0
      %1517 = vmatmul.mubr.bf16.gmra.mxu0 %v1373
      %v1518 = vpop.f32.mrf.mxu0
      %v1519 = vadd.f32 0.0, %v1518
      %v1520 = vpop.f32.mrf.mxu0
      %v1521 = vadd.f32 0.0, %v1520
      %v1522 = vpop.f32.mrf.mxu0
      %v1523 = vadd.f32 0.0, %v1522
      %v1524 = vpop.f32.mrf.mxu0
      %v1525 = vadd.f32 0.0, %v1524
      %1526 = vmatprep.mubr.bf16.mxu0 0
      %1527 = vmatmul.mubr.bf16.gmra.mxu0 %v1374
      %v1528 = vpop.f32.mrf.mxu0
      %v1529 = vadd.f32 0.0, %v1528
      %v1530 = vpop.f32.mrf.mxu0
      %v1531 = vadd.f32 0.0, %v1530
      %v1532 = vpop.f32.mrf.mxu0
      %v1533 = vadd.f32 0.0, %v1532
      %v1534 = vpop.f32.mrf.mxu0
      %v1535 = vadd.f32 0.0, %v1534
      %1536 = vmatprep.mubr.bf16.mxu0 0
      %1537 = vmatmul.mubr.bf16.gmra.mxu0 %v1375
      %v1538 = vpop.f32.mrf.mxu0
      %v1539 = vadd.f32 0.0, %v1538
      %v1540 = vpop.f32.mrf.mxu0
      %v1541 = vadd.f32 0.0, %v1540
      %v1542 = vpop.f32.mrf.mxu0
      %v1543 = vadd.f32 0.0, %v1542
      %v1544 = vpop.f32.mrf.mxu0
      %v1545 = vadd.f32 0.0, %v1544
      %1546 = vmatprep.mubr.bf16.mxu0 0
      %1547 = vmatmul.mubr.bf16.gmra.mxu0 %v1376
      %v1548 = vpop.f32.mrf.mxu0
      %v1549 = vadd.f32 0.0, %v1548
      %v1550 = vpop.f32.mrf.mxu0
      %v1551 = vadd.f32 0.0, %v1550
      %v1552 = vpop.f32.mrf.mxu0
      %v1553 = vadd.f32 0.0, %v1552
      %v1554 = vpop.f32.mrf.mxu0
      %v1555 = vadd.f32 0.0, %v1554
      %1556 = vmatprep.mubr.bf16.mxu0 0
      %1557 = vmatmul.mubr.bf16.gmra.mxu0 %v1377
      %v1558 = vpop.f32.mrf.mxu0
      %v1559 = vadd.f32 0.0, %v1558
      %v1560 = vpop.f32.mrf.mxu0
      %v1561 = vadd.f32 0.0, %v1560
      %v1562 = vpop.f32.mrf.mxu0
      %v1563 = vadd.f32 0.0, %v1562
      %v1564 = vpop.f32.mrf.mxu0
      %v1565 = vadd.f32 0.0, %v1564
      %1566 = vmatprep.mubr.bf16.mxu0 0
      %1567 = vmatmul.mubr.bf16.gmra.mxu0 %v1378
      %v1568 = vpop.f32.mrf.mxu0
      %v1569 = vadd.f32 0.0, %v1568
      %v1570 = vpop.f32.mrf.mxu0
      %v1571 = vadd.f32 0.0, %v1570
      %v1572 = vpop.f32.mrf.mxu0
      %v1573 = vadd.f32 0.0, %v1572
      %v1574 = vpop.f32.mrf.mxu0
      %v1575 = vadd.f32 0.0, %v1574
      %1576 = vmatprep.mubr.bf16.mxu0 0
      %1577 = vmatmul.mubr.bf16.gmra.mxu0 %v1379
      %v1578 = vpop.f32.mrf.mxu0
      %v1579 = vadd.f32 0.0, %v1578
      %v1580 = vpop.f32.mrf.mxu0
      %v1581 = vadd.f32 0.0, %v1580
      %v1582 = vpop.f32.mrf.mxu0
      %v1583 = vadd.f32 0.0, %v1582
      %v1584 = vpop.f32.mrf.mxu0
      %v1585 = vadd.f32 0.0, %v1584
      %1586 = vmatprep.mubr.bf16.mxu0 0
      %1587 = vmatmul.mubr.bf16.gmra.mxu0 %v1380
      %v1588 = vpop.f32.mrf.mxu0
      %v1589 = vadd.f32 0.0, %v1588
      %v1590 = vpop.f32.mrf.mxu0
      %v1591 = vadd.f32 0.0, %v1590
      %v1592 = vpop.f32.mrf.mxu0
      %v1593 = vadd.f32 0.0, %v1592
      %v1594 = vpop.f32.mrf.mxu0
      %v1595 = vadd.f32 0.0, %v1594
      %1596 = vmatprep.mubr.bf16.mxu0 0
      %1597 = vmatmul.mubr.bf16.gmra.mxu0 %v1381
      %v1598 = vpop.f32.mrf.mxu0
      %v1599 = vadd.f32 0.0, %v1598
      %v1600 = vpop.f32.mrf.mxu0
      %v1601 = vadd.f32 0.0, %v1600
      %v1602 = vpop.f32.mrf.mxu0
      %v1603 = vadd.f32 0.0, %v1602
      %v1604 = vpop.f32.mrf.mxu0
      %v1605 = vadd.f32 0.0, %v1604
      %1606 = vdwg.mxu0
      %v1607 = vmax.f32 %v1449, %v1451
      %1608 = vmax.xlane.f32.xlu0 %v1607
      %v1609 = vpop.xlane.xlu0 %1608
      %v1610 = vmax.f32 %v1453, %v1455
      %1611 = vmax.xlane.f32.xlu0 %v1610
      %v1612 = vpop.xlane.xlu0 %1611
      %v1613 = vmax.f32 %v1459, %v1461
      %1614 = vmax.xlane.f32.xlu0 %v1613
      %v1615 = vpop.xlane.xlu0 %1614
      %v1616 = vmax.f32 %v1463, %v1465
      %1617 = vmax.xlane.f32.xlu0 %v1616
      %v1618 = vpop.xlane.xlu0 %1617
      %v1619 = vmax.f32 %v1469, %v1471
      %1620 = vmax.xlane.f32.xlu0 %v1619
      %v1621 = vpop.xlane.xlu0 %1620
      %v1622 = vmax.f32 %v1473, %v1475
      %1623 = vmax.xlane.f32.xlu0 %v1622
      %v1624 = vpop.xlane.xlu0 %1623
      %v1625 = vmax.f32 %v1479, %v1481
      %1626 = vmax.xlane.f32.xlu0 %v1625
      %v1627 = vpop.xlane.xlu0 %1626
      %v1628 = vmax.f32 %v1483, %v1485
      %1629 = vmax.xlane.f32.xlu0 %v1628
      %v1630 = vpop.xlane.xlu0 %1629
      %v1631 = vmax.f32 %v1489, %v1491
      %1632 = vmax.xlane.f32.xlu0 %v1631
      %v1633 = vpop.xlane.xlu0 %1632
      %v1634 = vmax.f32 %v1493, %v1495
      %1635 = vmax.xlane.f32.xlu0 %v1634
      %v1636 = vpop.xlane.xlu0 %1635
      %v1637 = vmax.f32 %v1499, %v1501
      %1638 = vmax.xlane.f32.xlu0 %v1637
      %v1639 = vpop.xlane.xlu0 %1638
      %v1640 = vmax.f32 %v1503, %v1505
      %1641 = vmax.xlane.f32.xlu0 %v1640
      %v1642 = vpop.xlane.xlu0 %1641
      %v1643 = vmax.f32 %v1509, %v1511
      %1644 = vmax.xlane.f32.xlu0 %v1643
      %v1645 = vpop.xlane.xlu0 %1644
      %v1646 = vmax.f32 %v1513, %v1515
      %1647 = vmax.xlane.f32.xlu0 %v1646
      %v1648 = vpop.xlane.xlu0 %1647
      %v1649 = vmax.f32 %v1519, %v1521
      %1650 = vmax.xlane.f32.xlu0 %v1649
      %v1651 = vpop.xlane.xlu0 %1650
      %v1652 = vmax.f32 %v1523, %v1525
      %1653 = vmax.xlane.f32.xlu0 %v1652
      %v1654 = vpop.xlane.xlu0 %1653
      %v1655 = vmax.f32 %v1529, %v1531
      %1656 = vmax.xlane.f32.xlu0 %v1655
      %v1657 = vpop.xlane.xlu0 %1656
      %v1658 = vmax.f32 %v1533, %v1535
      %1659 = vmax.xlane.f32.xlu0 %v1658
      %v1660 = vpop.xlane.xlu0 %1659
      %v1661 = vmax.f32 %v1539, %v1541
      %1662 = vmax.xlane.f32.xlu0 %v1661
      %v1663 = vpop.xlane.xlu0 %1662
      %v1664 = vmax.f32 %v1543, %v1545
      %1665 = vmax.xlane.f32.xlu0 %v1664
      %v1666 = vpop.xlane.xlu0 %1665
      %v1667 = vmax.f32 %v1549, %v1551
      %1668 = vmax.xlane.f32.xlu0 %v1667
      %v1669 = vpop.xlane.xlu0 %1668
      %v1670 = vmax.f32 %v1553, %v1555
      %1671 = vmax.xlane.f32.xlu0 %v1670
      %v1672 = vpop.xlane.xlu0 %1671
      %v1673 = vmax.f32 %v1559, %v1561
      %1674 = vmax.xlane.f32.xlu0 %v1673
      %v1675 = vpop.xlane.xlu0 %1674
      %v1676 = vmax.f32 %v1563, %v1565
      %1677 = vmax.xlane.f32.xlu0 %v1676
      %v1678 = vpop.xlane.xlu0 %1677
      %v1679 = vmax.f32 %v1569, %v1571
      %1680 = vmax.xlane.f32.xlu0 %v1679
      %v1681 = vpop.xlane.xlu0 %1680
      %v1682 = vmax.f32 %v1573, %v1575
      %1683 = vmax.xlane.f32.xlu0 %v1682
      %v1684 = vpop.xlane.xlu0 %1683
      %v1685 = vmax.f32 %v1579, %v1581
      %1686 = vmax.xlane.f32.xlu0 %v1685
      %v1687 = vpop.xlane.xlu0 %1686
      %v1688 = vmax.f32 %v1583, %v1585
      %1689 = vmax.xlane.f32.xlu0 %v1688
      %v1690 = vpop.xlane.xlu0 %1689
      %v1691 = vmax.f32 %v1589, %v1591
      %1692 = vmax.xlane.f32.xlu0 %v1691
      %v1693 = vpop.xlane.xlu0 %1692
      %v1694 = vmax.f32 %v1593, %v1595
      %1695 = vmax.xlane.f32.xlu0 %v1694
      %v1696 = vpop.xlane.xlu0 %1695
      %v1697 = vmax.f32 %v1599, %v1601
      %1698 = vmax.xlane.f32.xlu0 %v1697
      %v1699 = vpop.xlane.xlu0 %1698
      %v1700 = vmax.f32 %v1603, %v1605
      %1701 = vmax.xlane.f32.xlu0 %v1700
      %v1702 = vpop.xlane.xlu0 %1701
      %v1703 = vsub.f32 %v1449, %v1609
      %v1704 = vsub.f32 %v1451, %v1609
      %v1705 = vsub.f32 %v1453, %v1612
      %v1706 = vsub.f32 %v1455, %v1612
      %v1707 = vsub.f32 %v1459, %v1615
      %v1708 = vsub.f32 %v1461, %v1615
      %v1709 = vsub.f32 %v1463, %v1618
      %v1710 = vsub.f32 %v1465, %v1618
      %v1711 = vsub.f32 %v1469, %v1621
      %v1712 = vsub.f32 %v1471, %v1621
      %v1713 = vsub.f32 %v1473, %v1624
      %v1714 = vsub.f32 %v1475, %v1624
      %v1715 = vsub.f32 %v1479, %v1627
      %v1716 = vsub.f32 %v1481, %v1627
      %v1717 = vsub.f32 %v1483, %v1630
      %v1718 = vsub.f32 %v1485, %v1630
      %v1719 = vsub.f32 %v1489, %v1633
      %v1720 = vsub.f32 %v1491, %v1633
      %v1721 = vsub.f32 %v1493, %v1636
      %v1722 = vsub.f32 %v1495, %v1636
      %v1723 = vsub.f32 %v1499, %v1639
      %v1724 = vsub.f32 %v1501, %v1639
      %v1725 = vsub.f32 %v1503, %v1642
      %v1726 = vsub.f32 %v1505, %v1642
      %v1727 = vsub.f32 %v1509, %v1645
      %v1728 = vsub.f32 %v1511, %v1645
      %v1729 = vsub.f32 %v1513, %v1648
      %v1730 = vsub.f32 %v1515, %v1648
      %v1731 = vsub.f32 %v1519, %v1651
      %v1732 = vsub.f32 %v1521, %v1651
      %v1733 = vsub.f32 %v1523, %v1654
      %v1734 = vsub.f32 %v1525, %v1654
      %v1735 = vsub.f32 %v1529, %v1657
      %v1736 = vsub.f32 %v1531, %v1657
      %v1737 = vsub.f32 %v1533, %v1660
      %v1738 = vsub.f32 %v1535, %v1660
      %v1739 = vsub.f32 %v1539, %v1663
      %v1740 = vsub.f32 %v1541, %v1663
      %v1741 = vsub.f32 %v1543, %v1666
      %v1742 = vsub.f32 %v1545, %v1666
      %v1743 = vsub.f32 %v1549, %v1669
      %v1744 = vsub.f32 %v1551, %v1669
      %v1745 = vsub.f32 %v1553, %v1672
      %v1746 = vsub.f32 %v1555, %v1672
      %v1747 = vsub.f32 %v1559, %v1675
      %v1748 = vsub.f32 %v1561, %v1675
      %v1749 = vsub.f32 %v1563, %v1678
      %v1750 = vsub.f32 %v1565, %v1678
      %v1751 = vsub.f32 %v1569, %v1681
      %v1752 = vsub.f32 %v1571, %v1681
      %v1753 = vsub.f32 %v1573, %v1684
      %v1754 = vsub.f32 %v1575, %v1684
      %v1755 = vsub.f32 %v1579, %v1687
      %v1756 = vsub.f32 %v1581, %v1687
      %v1757 = vsub.f32 %v1583, %v1690
      %v1758 = vsub.f32 %v1585, %v1690
      %v1759 = vsub.f32 %v1589, %v1693
      %v1760 = vsub.f32 %v1591, %v1693
      %v1761 = vsub.f32 %v1593, %v1696
      %v1762 = vsub.f32 %v1595, %v1696
      %v1763 = vsub.f32 %v1599, %v1699
      %v1764 = vsub.f32 %v1601, %v1699
      %v1765 = vsub.f32 %v1603, %v1702
      %v1766 = vsub.f32 %v1605, %v1702
      %v1767 = vmul.f32 %v1703, 1.442695
      %v1768 = vpow.pop %v1767
      %v1769 = vmul.f32 %v1704, 1.442695
      %v1770 = vpow.pop %v1769
      %v1771 = vmul.f32 %v1705, 1.442695
      %v1772 = vpow.pop %v1771
      %v1773 = vmul.f32 %v1706, 1.442695
      %v1774 = vpow.pop %v1773
      %v1775 = vmul.f32 %v1707, 1.442695
      %v1776 = vpow.pop %v1775
      %v1777 = vmul.f32 %v1708, 1.442695
      %v1778 = vpow.pop %v1777
      %v1779 = vmul.f32 %v1709, 1.442695
      %v1780 = vpow.pop %v1779
      %v1781 = vmul.f32 %v1710, 1.442695
      %v1782 = vpow.pop %v1781
      %v1783 = vmul.f32 %v1711, 1.442695
      %v1784 = vpow.pop %v1783
      %v1785 = vmul.f32 %v1712, 1.442695
      %v1786 = vpow.pop %v1785
      %v1787 = vmul.f32 %v1713, 1.442695
      %v1788 = vpow.pop %v1787
      %v1789 = vmul.f32 %v1714, 1.442695
      %v1790 = vpow.pop %v1789
      %v1791 = vmul.f32 %v1715, 1.442695
      %v1792 = vpow.pop %v1791
      %v1793 = vmul.f32 %v1716, 1.442695
      %v1794 = vpow.pop %v1793
      %v1795 = vmul.f32 %v1717, 1.442695
      %v1796 = vpow.pop %v1795
      %v1797 = vmul.f32 %v1718, 1.442695
      %v1798 = vpow.pop %v1797
      %v1799 = vmul.f32 %v1719, 1.442695
      %v1800 = vpow.pop %v1799
      %v1801 = vmul.f32 %v1720, 1.442695
      %v1802 = vpow.pop %v1801
      %v1803 = vmul.f32 %v1721, 1.442695
      %v1804 = vpow.pop %v1803
      %v1805 = vmul.f32 %v1722, 1.442695
      %v1806 = vpow.pop %v1805
      %v1807 = vmul.f32 %v1723, 1.442695
      %v1808 = vpow.pop %v1807
      %v1809 = vmul.f32 %v1724, 1.442695
      %v1810 = vpow.pop %v1809
      %v1811 = vmul.f32 %v1725, 1.442695
      %v1812 = vpow.pop %v1811
      %v1813 = vmul.f32 %v1726, 1.442695
      %v1814 = vpow.pop %v1813
      %v1815 = vmul.f32 %v1727, 1.442695
      %v1816 = vpow.pop %v1815
      %v1817 = vmul.f32 %v1728, 1.442695
      %v1818 = vpow.pop %v1817
      %v1819 = vmul.f32 %v1729, 1.442695
      %v1820 = vpow.pop %v1819
      %v1821 = vmul.f32 %v1730, 1.442695
      %v1822 = vpow.pop %v1821
      %v1823 = vmul.f32 %v1731, 1.442695
      %v1824 = vpow.pop %v1823
      %v1825 = vmul.f32 %v1732, 1.442695
      %v1826 = vpow.pop %v1825
      %v1827 = vmul.f32 %v1733, 1.442695
      %v1828 = vpow.pop %v1827
      %v1829 = vmul.f32 %v1734, 1.442695
      %v1830 = vpow.pop %v1829
      %v1831 = vmul.f32 %v1735, 1.442695
      %v1832 = vpow.pop %v1831
      %v1833 = vmul.f32 %v1736, 1.442695
      %v1834 = vpow.pop %v1833
      %v1835 = vmul.f32 %v1737, 1.442695
      %v1836 = vpow.pop %v1835
      %v1837 = vmul.f32 %v1738, 1.442695
      %v1838 = vpow.pop %v1837
      %v1839 = vmul.f32 %v1739, 1.442695
      %v1840 = vpow.pop %v1839
      %v1841 = vmul.f32 %v1740, 1.442695
      %v1842 = vpow.pop %v1841
      %v1843 = vmul.f32 %v1741, 1.442695
      %v1844 = vpow.pop %v1843
      %v1845 = vmul.f32 %v1742, 1.442695
      %v1846 = vpow.pop %v1845
      %v1847 = vmul.f32 %v1743, 1.442695
      %v1848 = vpow.pop %v1847
      %v1849 = vmul.f32 %v1744, 1.442695
      %v1850 = vpow.pop %v1849
      %v1851 = vmul.f32 %v1745, 1.442695
      %v1852 = vpow.pop %v1851
      %v1853 = vmul.f32 %v1746, 1.442695
      %v1854 = vpow.pop %v1853
      %v1855 = vmul.f32 %v1747, 1.442695
      %v1856 = vpow.pop %v1855
      %v1857 = vmul.f32 %v1748, 1.442695
      %v1858 = vpow.pop %v1857
      %v1859 = vmul.f32 %v1749, 1.442695
      %v1860 = vpow.pop %v1859
      %v1861 = vmul.f32 %v1750, 1.442695
      %v1862 = vpow.pop %v1861
      %v1863 = vmul.f32 %v1751, 1.442695
      %v1864 = vpow.pop %v1863
      %v1865 = vmul.f32 %v1752, 1.442695
      %v1866 = vpow.pop %v1865
      %v1867 = vmul.f32 %v1753, 1.442695
      %v1868 = vpow.pop %v1867
      %v1869 = vmul.f32 %v1754, 1.442695
      %v1870 = vpow.pop %v1869
      %v1871 = vmul.f32 %v1755, 1.442695
      %v1872 = vpow.pop %v1871
      %v1873 = vmul.f32 %v1756, 1.442695
      %v1874 = vpow.pop %v1873
      %v1875 = vmul.f32 %v1757, 1.442695
      %v1876 = vpow.pop %v1875
      %v1877 = vmul.f32 %v1758, 1.442695
      %v1878 = vpow.pop %v1877
      %v1879 = vmul.f32 %v1759, 1.442695
      %v1880 = vpow.pop %v1879
      %v1881 = vmul.f32 %v1760, 1.442695
      %v1882 = vpow.pop %v1881
      %v1883 = vmul.f32 %v1761, 1.442695
      %v1884 = vpow.pop %v1883
      %v1885 = vmul.f32 %v1762, 1.442695
      %v1886 = vpow.pop %v1885
      %v1887 = vmul.f32 %v1763, 1.442695
      %v1888 = vpow.pop %v1887
      %v1889 = vmul.f32 %v1764, 1.442695
      %v1890 = vpow.pop %v1889
      %v1891 = vmul.f32 %v1765, 1.442695
      %v1892 = vpow.pop %v1891
      %v1893 = vmul.f32 %v1766, 1.442695
      %v1894 = vpow.pop %v1893
      %v1895 = vadd.f32 %v1768, %v1770
      %1896 = vadd.xlane.f32.xlu0 %v1895
      %v1897 = vpop.xlane.xlu0 %1896
      %v1898 = vadd.f32 %v1772, %v1774
      %1899 = vadd.xlane.f32.xlu0 %v1898
      %v1900 = vpop.xlane.xlu0 %1899
      %v1901 = vadd.f32 %v1776, %v1778
      %1902 = vadd.xlane.f32.xlu0 %v1901
      %v1903 = vpop.xlane.xlu0 %1902
      %v1904 = vadd.f32 %v1780, %v1782
      %1905 = vadd.xlane.f32.xlu0 %v1904
      %v1906 = vpop.xlane.xlu0 %1905
      %v1907 = vadd.f32 %v1784, %v1786
      %1908 = vadd.xlane.f32.xlu0 %v1907
      %v1909 = vpop.xlane.xlu0 %1908
      %v1910 = vadd.f32 %v1788, %v1790
      %1911 = vadd.xlane.f32.xlu0 %v1910
      %v1912 = vpop.xlane.xlu0 %1911
      %v1913 = vadd.f32 %v1792, %v1794
      %1914 = vadd.xlane.f32.xlu0 %v1913
      %v1915 = vpop.xlane.xlu0 %1914
      %v1916 = vadd.f32 %v1796, %v1798
      %1917 = vadd.xlane.f32.xlu0 %v1916
      %v1918 = vpop.xlane.xlu0 %1917
      %v1919 = vadd.f32 %v1800, %v1802
      %1920 = vadd.xlane.f32.xlu0 %v1919
      %v1921 = vpop.xlane.xlu0 %1920
      %v1922 = vadd.f32 %v1804, %v1806
      %1923 = vadd.xlane.f32.xlu0 %v1922
      %v1924 = vpop.xlane.xlu0 %1923
      %v1925 = vadd.f32 %v1808, %v1810
      %1926 = vadd.xlane.f32.xlu0 %v1925
      %v1927 = vpop.xlane.xlu0 %1926
      %v1928 = vadd.f32 %v1812, %v1814
      %1929 = vadd.xlane.f32.xlu0 %v1928
      %v1930 = vpop.xlane.xlu0 %1929
      %v1931 = vadd.f32 %v1816, %v1818
      %1932 = vadd.xlane.f32.xlu0 %v1931
      %v1933 = vpop.xlane.xlu0 %1932
      %v1934 = vadd.f32 %v1820, %v1822
      %1935 = vadd.xlane.f32.xlu0 %v1934
      %v1936 = vpop.xlane.xlu0 %1935
      %v1937 = vadd.f32 %v1824, %v1826
      %1938 = vadd.xlane.f32.xlu0 %v1937
      %v1939 = vpop.xlane.xlu0 %1938
      %v1940 = vadd.f32 %v1828, %v1830
      %1941 = vadd.xlane.f32.xlu0 %v1940
      %v1942 = vpop.xlane.xlu0 %1941
      %v1943 = vadd.f32 %v1832, %v1834
      %1944 = vadd.xlane.f32.xlu0 %v1943
      %v1945 = vpop.xlane.xlu0 %1944
      %v1946 = vadd.f32 %v1836, %v1838
      %1947 = vadd.xlane.f32.xlu0 %v1946
      %v1948 = vpop.xlane.xlu0 %1947
      %v1949 = vadd.f32 %v1840, %v1842
      %1950 = vadd.xlane.f32.xlu0 %v1949
      %v1951 = vpop.xlane.xlu0 %1950
      %v1952 = vadd.f32 %v1844, %v1846
      %1953 = vadd.xlane.f32.xlu0 %v1952
      %v1954 = vpop.xlane.xlu0 %1953
      %v1955 = vadd.f32 %v1848, %v1850
      %1956 = vadd.xlane.f32.xlu0 %v1955
      %v1957 = vpop.xlane.xlu0 %1956
      %v1958 = vadd.f32 %v1852, %v1854
      %1959 = vadd.xlane.f32.xlu0 %v1958
      %v1960 = vpop.xlane.xlu0 %1959
      %v1961 = vadd.f32 %v1856, %v1858
      %1962 = vadd.xlane.f32.xlu0 %v1961
      %v1963 = vpop.xlane.xlu0 %1962
      %v1964 = vadd.f32 %v1860, %v1862
      %1965 = vadd.xlane.f32.xlu0 %v1964
      %v1966 = vpop.xlane.xlu0 %1965
      %v1967 = vadd.f32 %v1864, %v1866
      %1968 = vadd.xlane.f32.xlu0 %v1967
      %v1969 = vpop.xlane.xlu0 %1968
      %v1970 = vadd.f32 %v1868, %v1870
      %1971 = vadd.xlane.f32.xlu0 %v1970
      %v1972 = vpop.xlane.xlu0 %1971
      %v1973 = vadd.f32 %v1872, %v1874
      %1974 = vadd.xlane.f32.xlu0 %v1973
      %v1975 = vpop.xlane.xlu0 %1974
      %v1976 = vadd.f32 %v1876, %v1878
      %1977 = vadd.xlane.f32.xlu0 %v1976
      %v1978 = vpop.xlane.xlu0 %1977
      %v1979 = vadd.f32 %v1880, %v1882
      %1980 = vadd.xlane.f32.xlu0 %v1979
      %v1981 = vpop.xlane.xlu0 %1980
      %v1982 = vadd.f32 %v1884, %v1886
      %1983 = vadd.xlane.f32.xlu0 %v1982
      %v1984 = vpop.xlane.xlu0 %1983
      %v1985 = vadd.f32 %v1888, %v1890
      %1986 = vadd.xlane.f32.xlu0 %v1985
      %v1987 = vpop.xlane.xlu0 %1986
      %v1988 = vadd.f32 %v1892, %v1894
      %1989 = vadd.xlane.f32.xlu0 %v1988
      %v1990 = vpop.xlane.xlu0 %1989
      %v1991 = vpack.c.bf16 %v1772, %v1768
      %v1992 = vpack.c.bf16 %v1774, %v1770
      %v1993 = vpack.c.bf16 %v1780, %v1776
      %v1994 = vpack.c.bf16 %v1782, %v1778
      %v1995 = vpack.c.bf16 %v1788, %v1784
      %v1996 = vpack.c.bf16 %v1790, %v1786
      %v1997 = vpack.c.bf16 %v1796, %v1792
      %v1998 = vpack.c.bf16 %v1798, %v1794
      %v1999 = vpack.c.bf16 %v1804, %v1800
      %v2000 = vpack.c.bf16 %v1806, %v1802
      %v2001 = vpack.c.bf16 %v1812, %v1808
      %v2002 = vpack.c.bf16 %v1814, %v1810
      %v2003 = vpack.c.bf16 %v1820, %v1816
      %v2004 = vpack.c.bf16 %v1822, %v1818
      %v2005 = vpack.c.bf16 %v1828, %v1824
      %v2006 = vpack.c.bf16 %v1830, %v1826
      %v2007 = vpack.c.bf16 %v1836, %v1832
      %v2008 = vpack.c.bf16 %v1838, %v1834
      %v2009 = vpack.c.bf16 %v1844, %v1840
      %v2010 = vpack.c.bf16 %v1846, %v1842
      %v2011 = vpack.c.bf16 %v1852, %v1848
      %v2012 = vpack.c.bf16 %v1854, %v1850
      %v2013 = vpack.c.bf16 %v1860, %v1856
      %v2014 = vpack.c.bf16 %v1862, %v1858
      %v2015 = vpack.c.bf16 %v1868, %v1864
      %v2016 = vpack.c.bf16 %v1870, %v1866
      %v2017 = vpack.c.bf16 %v1876, %v1872
      %v2018 = vpack.c.bf16 %v1878, %v1874
      %v2019 = vpack.c.bf16 %v1884, %v1880
      %v2020 = vpack.c.bf16 %v1886, %v1882
      %v2021 = vpack.c.bf16 %v1892, %v1888
      %v2022 = vpack.c.bf16 %v1894, %v1890
      %2023 = vmatprep.subr.bf16.mxu0 0
      %2024 = vmatpush1.bf16.msra.mxu0 %v1405
      %2025 = vmatprep.subr.bf16.mxu0 0
      %2026 = vmatpush1.bf16.msra.mxu0 %v1404
      %2027 = vmatprep.subr.bf16.mxu0 0
      %2028 = vmatpush1.bf16.msra.mxu0 %v1403
      %2029 = vmatprep.subr.bf16.mxu0 0
      %2030 = vmatpush1.bf16.msra.mxu0 %v1402
      %2031 = vmatprep.subr.bf16.mxu0 0
      %2032 = vmatpush1.bf16.msra.mxu0 %v1401
      %2033 = vmatprep.subr.bf16.mxu0 0
      %2034 = vmatpush1.bf16.msra.mxu0 %v1400
      %2035 = vmatprep.subr.bf16.mxu0 0
      %2036 = vmatpush1.bf16.msra.mxu0 %v1399
      %2037 = vmatprep.subr.bf16.mxu0 0
      %2038 = vmatpush1.bf16.msra.mxu0 %v1398
      %2039 = vmatprep.subr.bf16.mxu0 0
      %2040 = vmatpush2.bf16.msra.mxu0 %v1413
      %2041 = vmatprep.subr.bf16.mxu0 0
      %2042 = vmatpush2.bf16.msra.mxu0 %v1412
      %2043 = vmatprep.subr.bf16.mxu0 0
      %2044 = vmatpush2.bf16.msra.mxu0 %v1411
      %2045 = vmatprep.subr.bf16.mxu0 0
      %2046 = vmatpush2.bf16.msra.mxu0 %v1410
      %2047 = vmatprep.subr.bf16.mxu0 0
      %2048 = vmatpush2.bf16.msra.mxu0 %v1409
      %2049 = vmatprep.subr.bf16.mxu0 0
      %2050 = vmatpush2.bf16.msra.mxu0 %v1408
      %2051 = vmatprep.subr.bf16.mxu0 0
      %2052 = vmatpush2.bf16.msra.mxu0 %v1407
      %2053 = vmatprep.subr.bf16.mxu0 0
      %2054 = vmatpush2.bf16.msra.mxu0 %v1406
      %2055 = vmatprep.mubr.bf16.mxu0 %v1992
      %2056 = vmatmul.mubr.bf16.gmra.mxu0 %v1991
      %v2057 = vpop.f32.mrf.mxu0
      %v2058 = vadd.f32 0.0, %v2057
      %v2059 = vpop.f32.mrf.mxu0
      %v2060 = vpop.f32.mrf.mxu0
      %v2061 = vadd.f32 0.0, %v2060
      %v2062 = vpop.f32.mrf.mxu0
      %2063 = vmatprep.mubr.bf16.mxu0 %v1994
      %2064 = vmatmul.mubr.bf16.gmra.mxu0 %v1993
      %v2065 = vpop.f32.mrf.mxu0
      %v2066 = vadd.f32 0.0, %v2065
      %v2067 = vpop.f32.mrf.mxu0
      %v2068 = vpop.f32.mrf.mxu0
      %v2069 = vadd.f32 0.0, %v2068
      %v2070 = vpop.f32.mrf.mxu0
      %2071 = vmatprep.mubr.bf16.mxu0 %v1996
      %2072 = vmatmul.mubr.bf16.gmra.mxu0 %v1995
      %v2073 = vpop.f32.mrf.mxu0
      %v2074 = vadd.f32 0.0, %v2073
      %v2075 = vpop.f32.mrf.mxu0
      %v2076 = vpop.f32.mrf.mxu0
      %v2077 = vadd.f32 0.0, %v2076
      %v2078 = vpop.f32.mrf.mxu0
      %2079 = vmatprep.mubr.bf16.mxu0 %v1998
      %2080 = vmatmul.mubr.bf16.gmra.mxu0 %v1997
      %v2081 = vpop.f32.mrf.mxu0
      %v2082 = vadd.f32 0.0, %v2081
      %v2083 = vpop.f32.mrf.mxu0
      %v2084 = vpop.f32.mrf.mxu0
      %v2085 = vadd.f32 0.0, %v2084
      %v2086 = vpop.f32.mrf.mxu0
      %2087 = vmatprep.mubr.bf16.mxu0 %v2000
      %2088 = vmatmul.mubr.bf16.gmra.mxu0 %v1999
      %v2089 = vpop.f32.mrf.mxu0
      %v2090 = vadd.f32 0.0, %v2089
      %v2091 = vpop.f32.mrf.mxu0
      %v2092 = vpop.f32.mrf.mxu0
      %v2093 = vadd.f32 0.0, %v2092
      %v2094 = vpop.f32.mrf.mxu0
      %2095 = vmatprep.mubr.bf16.mxu0 %v2002
      %2096 = vmatmul.mubr.bf16.gmra.mxu0 %v2001
      %v2097 = vpop.f32.mrf.mxu0
      %v2098 = vadd.f32 0.0, %v2097
      %v2099 = vpop.f32.mrf.mxu0
      %v2100 = vpop.f32.mrf.mxu0
      %v2101 = vadd.f32 0.0, %v2100
      %v2102 = vpop.f32.mrf.mxu0
      %2103 = vmatprep.mubr.bf16.mxu0 %v2004
      %2104 = vmatmul.mubr.bf16.gmra.mxu0 %v2003
      %v2105 = vpop.f32.mrf.mxu0
      %v2106 = vadd.f32 0.0, %v2105
      %v2107 = vpop.f32.mrf.mxu0
      %v2108 = vpop.f32.mrf.mxu0
      %v2109 = vadd.f32 0.0, %v2108
      %v2110 = vpop.f32.mrf.mxu0
      %2111 = vmatprep.mubr.bf16.mxu0 %v2006
      %2112 = vmatmul.mubr.bf16.gmra.mxu0 %v2005
      %v2113 = vpop.f32.mrf.mxu0
      %v2114 = vadd.f32 0.0, %v2113
      %v2115 = vpop.f32.mrf.mxu0
      %v2116 = vpop.f32.mrf.mxu0
      %v2117 = vadd.f32 0.0, %v2116
      %v2118 = vpop.f32.mrf.mxu0
      %2119 = vmatprep.mubr.bf16.mxu0 %v2008
      %2120 = vmatmul.mubr.bf16.gmra.mxu0 %v2007
      %v2121 = vpop.f32.mrf.mxu0
      %v2122 = vadd.f32 0.0, %v2121
      %v2123 = vpop.f32.mrf.mxu0
      %v2124 = vpop.f32.mrf.mxu0
      %v2125 = vadd.f32 0.0, %v2124
      %v2126 = vpop.f32.mrf.mxu0
      %2127 = vmatprep.mubr.bf16.mxu0 %v2010
      %2128 = vmatmul.mubr.bf16.gmra.mxu0 %v2009
      %v2129 = vpop.f32.mrf.mxu0
      %v2130 = vadd.f32 0.0, %v2129
      %v2131 = vpop.f32.mrf.mxu0
      %v2132 = vpop.f32.mrf.mxu0
      %v2133 = vadd.f32 0.0, %v2132
      %v2134 = vpop.f32.mrf.mxu0
      %2135 = vmatprep.mubr.bf16.mxu0 %v2012
      %2136 = vmatmul.mubr.bf16.gmra.mxu0 %v2011
      %v2137 = vpop.f32.mrf.mxu0
      %v2138 = vadd.f32 0.0, %v2137
      %v2139 = vpop.f32.mrf.mxu0
      %v2140 = vpop.f32.mrf.mxu0
      %v2141 = vadd.f32 0.0, %v2140
      %v2142 = vpop.f32.mrf.mxu0
      %2143 = vmatprep.mubr.bf16.mxu0 %v2014
      %2144 = vmatmul.mubr.bf16.gmra.mxu0 %v2013
      %v2145 = vpop.f32.mrf.mxu0
      %v2146 = vadd.f32 0.0, %v2145
      %v2147 = vpop.f32.mrf.mxu0
      %v2148 = vpop.f32.mrf.mxu0
      %v2149 = vadd.f32 0.0, %v2148
      %v2150 = vpop.f32.mrf.mxu0
      %2151 = vmatprep.mubr.bf16.mxu0 %v2016
      %2152 = vmatmul.mubr.bf16.gmra.mxu0 %v2015
      %v2153 = vpop.f32.mrf.mxu0
      %v2154 = vadd.f32 0.0, %v2153
      %v2155 = vpop.f32.mrf.mxu0
      %v2156 = vpop.f32.mrf.mxu0
      %v2157 = vadd.f32 0.0, %v2156
      %v2158 = vpop.f32.mrf.mxu0
      %2159 = vmatprep.mubr.bf16.mxu0 %v2018
      %2160 = vmatmul.mubr.bf16.gmra.mxu0 %v2017
      %v2161 = vpop.f32.mrf.mxu0
      %v2162 = vadd.f32 0.0, %v2161
      %v2163 = vpop.f32.mrf.mxu0
      %v2164 = vpop.f32.mrf.mxu0
      %v2165 = vadd.f32 0.0, %v2164
      %v2166 = vpop.f32.mrf.mxu0
      %2167 = vmatprep.mubr.bf16.mxu0 %v2020
      %2168 = vmatmul.mubr.bf16.gmra.mxu0 %v2019
      %v2169 = vpop.f32.mrf.mxu0
      %v2170 = vadd.f32 0.0, %v2169
      %v2171 = vpop.f32.mrf.mxu0
      %v2172 = vpop.f32.mrf.mxu0
      %v2173 = vadd.f32 0.0, %v2172
      %v2174 = vpop.f32.mrf.mxu0
      %2175 = vmatprep.mubr.bf16.mxu0 %v2022
      %2176 = vmatmul.mubr.bf16.gmra.mxu0 %v2021
      %v2177 = vpop.f32.mrf.mxu0
      %v2178 = vadd.f32 0.0, %v2177
      %v2179 = vpop.f32.mrf.mxu0
      %v2180 = vpop.f32.mrf.mxu0
      %v2181 = vadd.f32 0.0, %v2180
      %v2182 = vpop.f32.mrf.mxu0
      %2183 = vdwg.mxu0
      %v2184 = vrcp.pop %v1897
      %v2185 = vrcp.pop %v1900
      %v2186 = vrcp.pop %v1903
      %v2187 = vrcp.pop %v1906
      %v2188 = vrcp.pop %v1909
      %v2189 = vrcp.pop %v1912
      %v2190 = vrcp.pop %v1915
      %v2191 = vrcp.pop %v1918
      %v2192 = vrcp.pop %v1921
      %v2193 = vrcp.pop %v1924
      %v2194 = vrcp.pop %v1927
      %v2195 = vrcp.pop %v1930
      %v2196 = vrcp.pop %v1933
      %v2197 = vrcp.pop %v1936
      %v2198 = vrcp.pop %v1939
      %v2199 = vrcp.pop %v1942
      %v2200 = vrcp.pop %v1945
      %v2201 = vrcp.pop %v1948
      %v2202 = vrcp.pop %v1951
      %v2203 = vrcp.pop %v1954
      %v2204 = vrcp.pop %v1957
      %v2205 = vrcp.pop %v1960
      %v2206 = vrcp.pop %v1963
      %v2207 = vrcp.pop %v1966
      %v2208 = vrcp.pop %v1969
      %v2209 = vrcp.pop %v1972
      %v2210 = vrcp.pop %v1975
      %v2211 = vrcp.pop %v1978
      %v2212 = vrcp.pop %v1981
      %v2213 = vrcp.pop %v1984
      %v2214 = vrcp.pop %v1987
      %v2215 = vrcp.pop %v1990
      %v2216 = vmul.f32 %v2058, %v2184
      %v2217 = vmul.f32 %v2061, %v2185
      %v2218 = vmul.f32 %v2066, %v2186
      %v2219 = vmul.f32 %v2069, %v2187
      %v2220 = vmul.f32 %v2074, %v2188
      %v2221 = vmul.f32 %v2077, %v2189
      %v2222 = vmul.f32 %v2082, %v2190
      %v2223 = vmul.f32 %v2085, %v2191
      %v2224 = vmul.f32 %v2090, %v2192
      %v2225 = vmul.f32 %v2093, %v2193
      %v2226 = vmul.f32 %v2098, %v2194
      %v2227 = vmul.f32 %v2101, %v2195
      %v2228 = vmul.f32 %v2106, %v2196
      %v2229 = vmul.f32 %v2109, %v2197
      %v2230 = vmul.f32 %v2114, %v2198
      %v2231 = vmul.f32 %v2117, %v2199
      %v2232 = vmul.f32 %v2122, %v2200
      %v2233 = vmul.f32 %v2125, %v2201
      %v2234 = vmul.f32 %v2130, %v2202
      %v2235 = vmul.f32 %v2133, %v2203
      %v2236 = vmul.f32 %v2138, %v2204
      %v2237 = vmul.f32 %v2141, %v2205
      %v2238 = vmul.f32 %v2146, %v2206
      %v2239 = vmul.f32 %v2149, %v2207
      %v2240 = vmul.f32 %v2154, %v2208
      %v2241 = vmul.f32 %v2157, %v2209
      %v2242 = vmul.f32 %v2162, %v2210
      %v2243 = vmul.f32 %v2165, %v2211
      %v2244 = vmul.f32 %v2170, %v2212
      %v2245 = vmul.f32 %v2173, %v2213
      %v2246 = vmul.f32 %v2178, %v2214
      %v2247 = vmul.f32 %v2181, %v2215
      %v2248 = vpack.c.bf16 %v2217, %v2216
      %v2249 = vpack.c.bf16 %v2219, %v2218
      %v2250 = vpack.c.bf16 %v2221, %v2220
      %v2251 = vpack.c.bf16 %v2223, %v2222
      %v2252 = vpack.c.bf16 %v2225, %v2224
      %v2253 = vpack.c.bf16 %v2227, %v2226
      %v2254 = vpack.c.bf16 %v2229, %v2228
      %v2255 = vpack.c.bf16 %v2231, %v2230
      %v2256 = vpack.c.bf16 %v2233, %v2232
      %v2257 = vpack.c.bf16 %v2235, %v2234
      %v2258 = vpack.c.bf16 %v2237, %v2236
      %v2259 = vpack.c.bf16 %v2239, %v2238
      %v2260 = vpack.c.bf16 %v2241, %v2240
      %v2261 = vpack.c.bf16 %v2243, %v2242
      %v2262 = vpack.c.bf16 %v2245, %v2244
      %v2263 = vpack.c.bf16 %v2247, %v2246
      %v2264 = vld [vmem:[%s6] sm:$0xf]
      %v2265 = vld [vmem:[%s6 + $0x4] sm:$0xf]
      %v2266 = vld [vmem:[%s6 + $0x8] sm:$0xf]
      %v2267 = vld [vmem:[%s6 + $0xc] sm:$0xf]
      %v2268 = vld [vmem:[%s6 + $0x10] sm:$0xf]
      %v2269 = vld [vmem:[%s6 + $0x14] sm:$0xf]
      %v2270 = vld [vmem:[%s6 + $0x18] sm:$0xf]
      %v2271 = vld [vmem:[%s6 + $0x1c] sm:$0xf]
      %v2272 = vld [vmem:[%s6 + $0x20] sm:$0xf]
      %v2273 = vld [vmem:[%s6 + $0x24] sm:$0xf]
      %v2274 = vld [vmem:[%s6 + $0x28] sm:$0xf]
      %v2275 = vld [vmem:[%s6 + $0x2c] sm:$0xf]
      %v2276 = vld [vmem:[%s6 + $0x30] sm:$0xf]
      %v2277 = vld [vmem:[%s6 + $0x34] sm:$0xf]
      %v2278 = vld [vmem:[%s6 + $0x38] sm:$0xf]
      %v2279 = vld [vmem:[%s6 + $0x3c] sm:$0xf]
      %v2280 = vld [vmem:[%s7] sm:$0x1]
      %v2282 = vlaneseq
      %v2283 = vshrl.u32 %v2282, 7
      %v2284 = vsub.s32 0, %v2283
      %v2285 = vrot.slane %v2280, %v2284
      %v2303 = vunpack.c.l.b16 %v2264
      %v2304 = vunpack.c.l.b16 %v2265
      %v2305 = vunpack.c.l.b16 %v2266
      %v2306 = vunpack.c.l.b16 %v2267
      %v2307 = vunpack.c.l.b16 %v2268
      %v2308 = vunpack.c.l.b16 %v2269
      %v2309 = vunpack.c.l.b16 %v2270
      %v2310 = vunpack.c.l.b16 %v2271
      %v2311 = vunpack.c.l.b16 %v2272
      %v2312 = vunpack.c.l.b16 %v2273
      %v2313 = vunpack.c.l.b16 %v2274
      %v2314 = vunpack.c.l.b16 %v2275
      %v2315 = vunpack.c.l.b16 %v2276
      %v2316 = vunpack.c.l.b16 %v2277
      %v2317 = vunpack.c.l.b16 %v2278
      %v2318 = vunpack.c.l.b16 %v2279
      %v2319 = vpack.c.b16 %v2304, %v2303
      %v2320 = vpack.c.b16 %v2306, %v2305
      %v2321 = vpack.c.b16 %v2308, %v2307
      %v2322 = vpack.c.b16 %v2310, %v2309
      %v2323 = vpack.c.b16 %v2312, %v2311
      %v2324 = vpack.c.b16 %v2314, %v2313
      %v2325 = vpack.c.b16 %v2316, %v2315
      %v2326 = vpack.c.b16 %v2318, %v2317
      %2335 = vmatprep.subr.bf16.mxu0 0
      %2336 = vmatpush1.bf16.msra.mxu0 %v2326
      %2337 = vmatprep.subr.bf16.mxu0 0
      %2338 = vmatpush1.bf16.msra.mxu0 %v2325
      %2339 = vmatprep.subr.bf16.mxu0 0
      %2340 = vmatpush1.bf16.msra.mxu0 %v2324
      %2341 = vmatprep.subr.bf16.mxu0 0
      %2342 = vmatpush1.bf16.msra.mxu0 %v2323
      %2343 = vmatprep.subr.bf16.mxu0 0
      %2344 = vmatpush1.bf16.msra.mxu0 %v2322
      %2345 = vmatprep.subr.bf16.mxu0 0
      %2346 = vmatpush1.bf16.msra.mxu0 %v2321
      %2347 = vmatprep.subr.bf16.mxu0 0
      %2348 = vmatpush1.bf16.msra.mxu0 %v2320
      %2349 = vmatprep.subr.bf16.mxu0 0
      %2350 = vmatpush1.bf16.msra.mxu0 %v2319
      %2351 = vmatprep.subr.bf16.mxu0 0
      %2352 = vmatpush2.bf16.msra.mxu0 0
      %2353 = vmatprep.subr.bf16.mxu0 0
      %2354 = vmatpush2.bf16.msra.mxu0 0
      %2355 = vmatprep.subr.bf16.mxu0 0
      %2356 = vmatpush2.bf16.msra.mxu0 0
      %2357 = vmatprep.subr.bf16.mxu0 0
      %2358 = vmatpush2.bf16.msra.mxu0 0
      %2359 = vmatprep.subr.bf16.mxu0 0
      %2360 = vmatpush2.bf16.msra.mxu0 0
      %2361 = vmatprep.subr.bf16.mxu0 0
      %2362 = vmatpush2.bf16.msra.mxu0 0
      %2363 = vmatprep.subr.bf16.mxu0 0
      %2364 = vmatpush2.bf16.msra.mxu0 0
      %2365 = vmatprep.subr.bf16.mxu0 0
      %2366 = vmatpush2.bf16.msra.mxu0 0
      %2367 = vmatprep.mubr.bf16.mxu0 0
      %2368 = vmatmul.mubr.bf16.gmra.mxu0 %v2248
      %v2369 = vpop.f32.mrf.mxu0
      %v2370 = vadd.f32 %v2285, %v2369
      %v2371 = vpop.f32.mrf.mxu0
      %v2372 = vpop.f32.mrf.mxu0
      %v2373 = vadd.f32 %v2285, %v2372
      %v2374 = vpop.f32.mrf.mxu0
      %2375 = vmatprep.mubr.bf16.mxu0 0
      %2376 = vmatmul.mubr.bf16.gmra.mxu0 %v2249
      %v2377 = vpop.f32.mrf.mxu0
      %v2378 = vadd.f32 %v2285, %v2377
      %v2379 = vpop.f32.mrf.mxu0
      %v2380 = vpop.f32.mrf.mxu0
      %v2381 = vadd.f32 %v2285, %v2380
      %v2382 = vpop.f32.mrf.mxu0
      %2383 = vmatprep.mubr.bf16.mxu0 0
      %2384 = vmatmul.mubr.bf16.gmra.mxu0 %v2250
      %v2385 = vpop.f32.mrf.mxu0
      %v2386 = vadd.f32 %v2285, %v2385
      %v2387 = vpop.f32.mrf.mxu0
      %v2388 = vpop.f32.mrf.mxu0
      %v2389 = vadd.f32 %v2285, %v2388
      %v2390 = vpop.f32.mrf.mxu0
      %2391 = vmatprep.mubr.bf16.mxu0 0
      %2392 = vmatmul.mubr.bf16.gmra.mxu0 %v2251
      %v2393 = vpop.f32.mrf.mxu0
      %v2394 = vadd.f32 %v2285, %v2393
      %v2395 = vpop.f32.mrf.mxu0
      %v2396 = vpop.f32.mrf.mxu0
      %v2397 = vadd.f32 %v2285, %v2396
      %v2398 = vpop.f32.mrf.mxu0
      %2399 = vmatprep.mubr.bf16.mxu0 0
      %2400 = vmatmul.mubr.bf16.gmra.mxu0 %v2252
      %v2401 = vpop.f32.mrf.mxu0
      %v2402 = vadd.f32 %v2285, %v2401
      %v2403 = vpop.f32.mrf.mxu0
      %v2404 = vpop.f32.mrf.mxu0
      %v2405 = vadd.f32 %v2285, %v2404
      %v2406 = vpop.f32.mrf.mxu0
      %2407 = vmatprep.mubr.bf16.mxu0 0
      %2408 = vmatmul.mubr.bf16.gmra.mxu0 %v2253
      %v2409 = vpop.f32.mrf.mxu0
      %v2410 = vadd.f32 %v2285, %v2409
      %v2411 = vpop.f32.mrf.mxu0
      %v2412 = vpop.f32.mrf.mxu0
      %v2413 = vadd.f32 %v2285, %v2412
      %v2414 = vpop.f32.mrf.mxu0
      %2415 = vmatprep.mubr.bf16.mxu0 0
      %2416 = vmatmul.mubr.bf16.gmra.mxu0 %v2254
      %v2417 = vpop.f32.mrf.mxu0
      %v2418 = vadd.f32 %v2285, %v2417
      %v2419 = vpop.f32.mrf.mxu0
      %v2420 = vpop.f32.mrf.mxu0
      %v2421 = vadd.f32 %v2285, %v2420
      %v2422 = vpop.f32.mrf.mxu0
      %2423 = vmatprep.mubr.bf16.mxu0 0
      %2424 = vmatmul.mubr.bf16.gmra.mxu0 %v2255
      %v2425 = vpop.f32.mrf.mxu0
      %v2426 = vadd.f32 %v2285, %v2425
      %v2427 = vpop.f32.mrf.mxu0
      %v2428 = vpop.f32.mrf.mxu0
      %v2429 = vadd.f32 %v2285, %v2428
      %v2430 = vpop.f32.mrf.mxu0
      %2431 = vmatprep.mubr.bf16.mxu0 0
      %2432 = vmatmul.mubr.bf16.gmra.mxu0 %v2256
      %v2433 = vpop.f32.mrf.mxu0
      %v2434 = vadd.f32 %v2285, %v2433
      %v2435 = vpop.f32.mrf.mxu0
      %v2436 = vpop.f32.mrf.mxu0
      %v2437 = vadd.f32 %v2285, %v2436
      %v2438 = vpop.f32.mrf.mxu0
      %2439 = vmatprep.mubr.bf16.mxu0 0
      %2440 = vmatmul.mubr.bf16.gmra.mxu0 %v2257
      %v2441 = vpop.f32.mrf.mxu0
      %v2442 = vadd.f32 %v2285, %v2441
      %v2443 = vpop.f32.mrf.mxu0
      %v2444 = vpop.f32.mrf.mxu0
      %v2445 = vadd.f32 %v2285, %v2444
      %v2446 = vpop.f32.mrf.mxu0
      %2447 = vmatprep.mubr.bf16.mxu0 0
      %2448 = vmatmul.mubr.bf16.gmra.mxu0 %v2258
      %v2449 = vpop.f32.mrf.mxu0
      %v2450 = vadd.f32 %v2285, %v2449
      %v2451 = vpop.f32.mrf.mxu0
      %v2452 = vpop.f32.mrf.mxu0
      %v2453 = vadd.f32 %v2285, %v2452
      %v2454 = vpop.f32.mrf.mxu0
      %2455 = vmatprep.mubr.bf16.mxu0 0
      %2456 = vmatmul.mubr.bf16.gmra.mxu0 %v2259
      %v2457 = vpop.f32.mrf.mxu0
      %v2458 = vadd.f32 %v2285, %v2457
      %v2459 = vpop.f32.mrf.mxu0
      %v2460 = vpop.f32.mrf.mxu0
      %v2461 = vadd.f32 %v2285, %v2460
      %v2462 = vpop.f32.mrf.mxu0
      %2463 = vmatprep.mubr.bf16.mxu0 0
      %2464 = vmatmul.mubr.bf16.gmra.mxu0 %v2260
      %v2465 = vpop.f32.mrf.mxu0
      %v2466 = vadd.f32 %v2285, %v2465
      %v2467 = vpop.f32.mrf.mxu0
      %v2468 = vpop.f32.mrf.mxu0
      %v2469 = vadd.f32 %v2285, %v2468
      %v2470 = vpop.f32.mrf.mxu0
      %2471 = vmatprep.mubr.bf16.mxu0 0
      %2472 = vmatmul.mubr.bf16.gmra.mxu0 %v2261
      %v2473 = vpop.f32.mrf.mxu0
      %v2474 = vadd.f32 %v2285, %v2473
      %v2475 = vpop.f32.mrf.mxu0
      %v2476 = vpop.f32.mrf.mxu0
      %v2477 = vadd.f32 %v2285, %v2476
      %v2478 = vpop.f32.mrf.mxu0
      %2479 = vmatprep.mubr.bf16.mxu0 0
      %2480 = vmatmul.mubr.bf16.gmra.mxu0 %v2262
      %v2481 = vpop.f32.mrf.mxu0
      %v2482 = vadd.f32 %v2285, %v2481
      %v2483 = vpop.f32.mrf.mxu0
      %v2484 = vpop.f32.mrf.mxu0
      %v2485 = vadd.f32 %v2285, %v2484
      %v2486 = vpop.f32.mrf.mxu0
      %2487 = vmatprep.mubr.bf16.mxu0 0
      %2488 = vmatmul.mubr.bf16.gmra.mxu0 %v2263
      %v2489 = vpop.f32.mrf.mxu0
      %v2490 = vadd.f32 %v2285, %v2489
      %v2491 = vpop.f32.mrf.mxu0
      %v2492 = vpop.f32.mrf.mxu0
      %v2493 = vadd.f32 %v2285, %v2492
      %v2494 = vpop.f32.mrf.mxu0
      %2495 = vdwg.mxu0
      %2496 = vxpose.xlu0.b32.start [1/16] %v2370, 128
      %2497 = vxpose.xlu0.b32.cont [2/16] %v2373, 128
      %2498 = vxpose.xlu0.b32.cont [3/16] %v2378, 128
      %2499 = vxpose.xlu0.b32.cont [4/16] %v2381, 128
      %2500 = vxpose.xlu0.b32.cont [5/16] %v2386, 128
      %2501 = vxpose.xlu0.b32.cont [6/16] %v2389, 128
      %2502 = vxpose.xlu0.b32.cont [7/16] %v2394, 128
      %2503 = vxpose.xlu0.b32.cont [8/16] %v2397, 128
      %2504 = vxpose.xlu0.b32.cont [9/16] %v2402, 128
      %2505 = vxpose.xlu0.b32.cont [10/16] %v2405, 128
      %2506 = vxpose.xlu0.b32.cont [11/16] %v2410, 128
      %2507 = vxpose.xlu0.b32.cont [12/16] %v2413, 128
      %2508 = vxpose.xlu0.b32.cont [13/16] %v2418, 128
      %2509 = vxpose.xlu0.b32.cont [14/16] %v2421, 128
      %2510 = vxpose.xlu0.b32.cont [15/16] %v2426, 128
      %2511 = vxpose.xlu0.b32.end [16/16] %v2429, 128
      %v2512 = vpop.trf.xlu0
      %v2513 = vpop.trf.xlu0
      %v2514 = vpop.trf.xlu0
      %v2515 = vpop.trf.xlu0
      %v2516 = vpop.trf.xlu0
      %v2517 = vpop.trf.xlu0
      %v2518 = vpop.trf.xlu0
      %v2519 = vpop.trf.xlu0
      %v2520 = vpop.trf.xlu0
      %v2521 = vpop.trf.xlu0
      %v2522 = vpop.trf.xlu0
      %v2523 = vpop.trf.xlu0
      %v2524 = vpop.trf.xlu0
      %v2525 = vpop.trf.xlu0
      %v2526 = vpop.trf.xlu0
      %v2527 = vpop.trf.xlu0
      %2528 = vxpose.xlu0.b32.start [1/16] %v2434, 128
      %2529 = vxpose.xlu0.b32.cont [2/16] %v2437, 128
      %2530 = vxpose.xlu0.b32.cont [3/16] %v2442, 128
      %2531 = vxpose.xlu0.b32.cont [4/16] %v2445, 128
      %2532 = vxpose.xlu0.b32.cont [5/16] %v2450, 128
      %2533 = vxpose.xlu0.b32.cont [6/16] %v2453, 128
      %2534 = vxpose.xlu0.b32.cont [7/16] %v2458, 128
      %2535 = vxpose.xlu0.b32.cont [8/16] %v2461, 128
      %2536 = vxpose.xlu0.b32.cont [9/16] %v2466, 128
      %2537 = vxpose.xlu0.b32.cont [10/16] %v2469, 128
      %2538 = vxpose.xlu0.b32.cont [11/16] %v2474, 128
      %2539 = vxpose.xlu0.b32.cont [12/16] %v2477, 128
      %2540 = vxpose.xlu0.b32.cont [13/16] %v2482, 128
      %2541 = vxpose.xlu0.b32.cont [14/16] %v2485, 128
      %2542 = vxpose.xlu0.b32.cont [15/16] %v2490, 128
      %2543 = vxpose.xlu0.b32.end [16/16] %v2493, 128
      %v2544 = vpop.trf.xlu0
      %v2545 = vpop.trf.xlu0
      %v2546 = vpop.trf.xlu0
      %v2547 = vpop.trf.xlu0
      %v2548 = vpop.trf.xlu0
      %v2549 = vpop.trf.xlu0
      %v2550 = vpop.trf.xlu0
      %v2551 = vpop.trf.xlu0
      %v2552 = vpop.trf.xlu0
      %v2553 = vpop.trf.xlu0
      %v2554 = vpop.trf.xlu0
      %v2555 = vpop.trf.xlu0
      %v2556 = vpop.trf.xlu0
      %v2557 = vpop.trf.xlu0
      %v2558 = vpop.trf.xlu0
      %v2559 = vpop.trf.xlu0
      %v2560 = vadd.f32 %v307, %v2512
      %v2561 = vadd.f32 %v308, %v2544
      %v2562 = vadd.f32 %v309, %v2513
      %v2563 = vadd.f32 %v310, %v2545
      %v2564 = vadd.f32 %v311, %v2514
      %v2565 = vadd.f32 %v312, %v2546
      %v2566 = vadd.f32 %v313, %v2515
      %v2567 = vadd.f32 %v314, %v2547
      %v2568 = vadd.f32 %v315, %v2516
      %v2569 = vadd.f32 %v316, %v2548
      %v2570 = vadd.f32 %v317, %v2517
      %v2571 = vadd.f32 %v318, %v2549
      %v2572 = vadd.f32 %v319, %v2518
      %v2573 = vadd.f32 %v320, %v2550
      %v2574 = vadd.f32 %v321, %v2519
      %v2575 = vadd.f32 %v322, %v2551
      %v2576 = vadd.f32 %v323, %v2520
      %v2577 = vadd.f32 %v324, %v2552
      %v2578 = vadd.f32 %v325, %v2521
      %v2579 = vadd.f32 %v326, %v2553
      %v2580 = vadd.f32 %v327, %v2522
      %v2581 = vadd.f32 %v328, %v2554
      %v2582 = vadd.f32 %v329, %v2523
      %v2583 = vadd.f32 %v330, %v2555
      %v2584 = vadd.f32 %v331, %v2524
      %v2585 = vadd.f32 %v332, %v2556
      %v2586 = vadd.f32 %v333, %v2525
      %v2587 = vadd.f32 %v334, %v2557
      %v2588 = vadd.f32 %v335, %v2526
      %v2589 = vadd.f32 %v336, %v2558
      %v2590 = vadd.f32 %v337, %v2527
      %v2591 = vadd.f32 %v338, %v2559
      %2592 = vst [vmem:[%s305] sm:$0xff] %v2560
      %2593 = vst [vmem:[%s305 + $0x8] sm:$0xff] %v2561
      %2594 = vst [vmem:[%s305 + $0x10] sm:$0xff] %v2562
      %2595 = vst [vmem:[%s305 + $0x18] sm:$0xff] %v2563
      %2596 = vst [vmem:[%s305 + $0x20] sm:$0xff] %v2564
      %2597 = vst [vmem:[%s305 + $0x28] sm:$0xff] %v2565
      %2598 = vst [vmem:[%s305 + $0x30] sm:$0xff] %v2566
      %2599 = vst [vmem:[%s305 + $0x38] sm:$0xff] %v2567
      %2600 = vst [vmem:[%s305 + $0x40] sm:$0xff] %v2568
      %2601 = vst [vmem:[%s305 + $0x48] sm:$0xff] %v2569
      %2602 = vst [vmem:[%s305 + $0x50] sm:$0xff] %v2570
      %2603 = vst [vmem:[%s305 + $0x58] sm:$0xff] %v2571
      %2604 = vst [vmem:[%s305 + $0x60] sm:$0xff] %v2572
      %2605 = vst [vmem:[%s305 + $0x68] sm:$0xff] %v2573
      %2606 = vst [vmem:[%s305 + $0x70] sm:$0xff] %v2574
      %2607 = vst [vmem:[%s305 + $0x78] sm:$0xff] %v2575
      %2608 = vst [vmem:[%s305 + $0x80] sm:$0xff] %v2576
      %2609 = vst [vmem:[%s305 + $0x88] sm:$0xff] %v2577
      %2610 = vst [vmem:[%s305 + $0x90] sm:$0xff] %v2578
      %2611 = vst [vmem:[%s305 + $0x98] sm:$0xff] %v2579
      %2612 = vst [vmem:[%s305 + $0xa0] sm:$0xff] %v2580
      %2613 = vst [vmem:[%s305 + $0xa8] sm:$0xff] %v2581
      %2614 = vst [vmem:[%s305 + $0xb0] sm:$0xff] %v2582
      %2615 = vst [vmem:[%s305 + $0xb8] sm:$0xff] %v2583
      %2616 = vst [vmem:[%s305 + $0xc0] sm:$0xff] %v2584
      %2617 = vst [vmem:[%s305 + $0xc8] sm:$0xff] %v2585
      %2618 = vst [vmem:[%s305 + $0xd0] sm:$0xff] %v2586
      %2619 = vst [vmem:[%s305 + $0xd8] sm:$0xff] %v2587
      %2620 = vst [vmem:[%s305 + $0xe0] sm:$0xff] %v2588
      %2621 = vst [vmem:[%s305 + $0xe8] sm:$0xff] %v2589
      %2622 = vst [vmem:[%s305 + $0xf0] sm:$0xff] %v2590
      %2623 = vst [vmem:[%s305 + $0xf8] sm:$0xff] %v2591
      %p2624 = scmp.lt.s32.totalorder %s19, 1
      %s2625 = scalar_select %p2624, %s19, 1
      %s2626 = smul.addr %s2625, 32
      %s2627 = smul.addr %s2626, 8
      %s2628 = scalar_lea.vmem %s8, %s2627
      // Predicated region
      $region53: #{attn_block.1} parent=51 // pred_check
        %p2629 = pneg %p210
      $region54: #{attn_block.1} parent=51 // pred_check_branch
        %2631 = sbr.rel (%p2629) target = $region56
      $region55: #{attn_block.1} parent=51 // pred_region
        _
      $region56: #{attn_block.1} parent=51 // pred_fallthru
        _
    $region52: #{attn_block.1} parent=5 // pred_fallthru
      _
    %p2632 = scmp.le.s32.totalorder 2, %s14
    // Predicated region
    $region57: #{attn_block.1} parent=5 // pred_check
      %p2633 = pneg %p2632
    $region58: #{attn_block.1} parent=5 // pred_check_branch
      %2635 = sbr.rel (%p2633) target = $region60
    $region59: #{attn_block.1} parent=5 // pred_region
      %s2636 = ssub.s32 %s14, 2
      // Predicated region
      $region61: #{attn_block.1} parent=59 // pred_check
        %p2637 = pneg %p216
      $region62: #{attn_block.1} parent=59 // pred_check_branch
        %2639 = sbr.rel (%p2637) target = $region64
      $region63: #{attn_block.1} parent=59 // pred_region
        %p2640 = scmp.lt.s32.totalorder %s20, 1
        %s2641 = scalar_select %p2640, %s20, 1
        %s2642 = smul.addr %s2641, 32
        %s2643 = smul.addr %s2642, 8
        %s2644 = scalar_lea.vmem %s8, %s2643
      $region64: #{attn_block.1} parent=59 // pred_fallthru
        _
    $region60: #{attn_block.1} parent=5 // pred_fallthru
      _
  $region6: #{attn_block.1} parent=0 // loop_footer
    %s18 = sadd.s32 1, %s14
  $region7: #{attn_block.1} parent=0 // loop_footer_branch
    %13 = sbr.rel target = $region3
  $region8: #{attn_block.1} parent=0 // loop_exit
    _

</llo_original>
